<compile_context>
chip_gen: v5e
topology: v5e:2x2
jax: 0.10.0
libtpu: 0.0.40
codegen_flags: <defaults>
</compile_context>

<pallas_src>
import math

import jax
import jax.numpy as jnp
from jax import lax
from jax.experimental import pallas as pl
from jax.experimental.pallas import tpu as pltpu

# ----------------------------- model config (small, consistent shapes) ------
NUM_LAYERS = 2
D_MODEL = 32
NUM_HEADS = 4
D_HEAD = D_MODEL // NUM_HEADS
DFF = 64
HIDDEN_SIZE = 16
NUM_CLASSES = 2
VOCAB_SIZE = 50
MAX_SEQ = 16
LN_EPS = 1e-5
OUT_LANES = 128          # lane-dense packed output width


# ----------------------------- kernel ----------------------------------------
def _layernorm(x, gamma, beta):
    mean = jnp.mean(x, axis=-1, keepdims=True)
    var = jnp.mean((x - mean) ** 2, axis=-1, keepdims=True)
    return (x - mean) * lax.rsqrt(var + LN_EPS) * gamma + beta


def fused_forward_kernel(x_ref, mask_ref,
                         wq_ref, bq_ref, wk_ref, bk_ref, wv_ref, bv_ref,
                         wo_ref, bo_ref, g1_ref, be1_ref,
                         w1_ref, b1_ref, w2_ref, b2_ref, g2_ref, be2_ref,
                         wh1_ref, bh1_ref, wh2_ref, bh2_ref,
                         out_ref):
    x = x_ref[...]                       # (B, S, D) f32
    mask = mask_ref[...]                 # (B, S)    f32  (1 = token, 0 = pad)
    B, S, D = x.shape
    H, dh = NUM_HEADS, D_HEAD
    BS = B * S
    scale = 1.0 / math.sqrt(dh)

    # additive key mask, tiled over heads on the leading (head*batch) axis
    neg = ((1.0 - mask) * (-1e9))[:, None, :]          # (B, 1, S)
    neg_hb = jnp.concatenate([neg] * H, axis=0)        # (H*B, 1, S)

    def split_heads(t2):                 # (BS, D) f32 -> (H*B, S, dh) bf16
        t3 = t2.reshape(B, S, D)
        parts = [t3[:, :, h * dh:(h + 1) * dh] for h in range(H)]
        return jnp.concatenate(parts, axis=0).astype(jnp.bfloat16)

    h_act = x.reshape(BS, D)             # activations kept as (B*S, D) f32

    for l in range(NUM_LAYERS):          # static unroll over stacked weights
        xb = h_act.astype(jnp.bfloat16)

        # --- QKV projections (bf16 MXU operands, f32 accumulation) ---
        q = jnp.dot(xb, wq_ref[l], preferred_element_type=jnp.float32) + bq_ref[l]
        k = jnp.dot(xb, wk_ref[l], preferred_element_type=jnp.float32) + bk_ref[l]
        v = jnp.dot(xb, wv_ref[l], preferred_element_type=jnp.float32) + bv_ref[l]

        qh = split_heads(q)              # (H*B, S, dh) bf16
        kh = split_heads(k)
        vh = split_heads(v)

        # --- batched-over-heads attention (one einsum pair, not H small ones) ---
        s = jnp.einsum('bqd,bkd->bqk', qh, kh,
                       preferred_element_type=jnp.float32) * scale
        s = s + neg_hb
        m = jnp.max(s, axis=-1, keepdims=True)
        e = jnp.exp(s - m)                                   # f32, EUP
        p = e * pl.reciprocal(jnp.sum(e, axis=-1, keepdims=True), approx=True)
        ctx_hb = jnp.einsum('bqk,bkd->bqd', p.astype(jnp.bfloat16), vh,
                            preferred_element_type=jnp.float32)   # (H*B, S, dh)

        # re-pack heads into the feature dim
        ctx = jnp.concatenate(
            [ctx_hb[hh * B:(hh + 1) * B] for hh in range(H)], axis=-1)  # (B,S,D)
        ctx2 = ctx.reshape(BS, D).astype(jnp.bfloat16)

        attn_out = jnp.dot(ctx2, wo_ref[l],
                           preferred_element_type=jnp.float32) + bo_ref[l]
        x1 = _layernorm(h_act + attn_out, g1_ref[l], be1_ref[l])

        # --- position-wise feed-forward (ReLU), bf16 MXU / f32 accumulate ---
        hid = jnp.maximum(
            jnp.dot(x1.astype(jnp.bfloat16), w1_ref[l],
                    preferred_element_type=jnp.float32) + b1_ref[l], 0.0)
        ffn = jnp.dot(hid.astype(jnp.bfloat16), w2_ref[l],
                      preferred_element_type=jnp.float32) + b2_ref[l]
        h_act = _layernorm(x1 + ffn, g2_ref[l], be2_ref[l])

    # --- masked mean pooling over valid tokens ---
    x3 = h_act.reshape(B, S, D)
    msum = jnp.sum(x3 * mask[:, :, None], axis=1)                    # (B, D)
    denom = jnp.maximum(jnp.sum(mask, axis=1, keepdims=True), 1e-9)  # (B, 1)
    pooled = msum * pl.reciprocal(denom, approx=True)

    # --- fused heads: concatenated first layers, block-diagonal lane-padded
    #     second layer producing a single (B, 128) lane-dense output slab ---
    hcat = jnp.maximum(
        jnp.dot(pooled.astype(jnp.bfloat16), wh1_ref[...],
                preferred_element_type=jnp.float32) + bh1_ref[...], 0.0)
    logits = jnp.dot(hcat.astype(jnp.bfloat16), wh2_ref[...],
                     preferred_element_type=jnp.float32) + bh2_ref[...]  # (B,128)

    # sigmoid only on the sentiment column (exact divide keeps result in [0,1])
    col = lax.broadcasted_iota(jnp.int32, logits.shape, 1)
    sig = 1.0 / (1.0 + jnp.exp(-logits))
    out_ref[...] = jnp.where(col == NUM_CLASSES, sig, logits)


# ----------------------------- pallas_call wrapper ----------------------------
def _full_spec(shape):
    nd = len(shape)
    return pl.BlockSpec(shape, lambda i, nd=nd: (0,) * nd)


def multitask_forward(params, input_ids, attention_mask):
    B, S = input_ids.shape
    mask_f32 = attention_mask.astype(jnp.float32)

    # embedding lookup (gather) + positional embedding: glue in plain JAX
    # TODO(synk): in-kernel embedding gather would need scalar-prefetch Element specs.
    x = params["tok_emb"][input_ids] + params["pos_emb"][:S][None, :, :]
    x = x.astype(jnp.float32)

    ops = (x, mask_f32) + tuple(params["stacked"])
    out = pl.pallas_call(
        fused_forward_kernel,
        grid=(1,),
        in_specs=[_full_spec(a.shape) for a in ops],
        out_specs=_full_spec((B, OUT_LANES)),
        out_shape=jax.ShapeDtypeStruct((B, OUT_LANES), jnp.float32),
        compiler_params=pltpu.CompilerParams(
            dimension_semantics=("arbitrary",)),
    )(*ops)

    cls_out = out[:, :NUM_CLASSES]
    sent_out = out[:, NUM_CLASSES:NUM_CLASSES + 1]
    return cls_out, sent_out


# ----------------------------- parameters ------------------------------------
def init_params(key):
    keys = iter(jax.random.split(key, 64))

    def dense(k, din, dout):
        w = jax.random.normal(k, (din, dout), jnp.float32) * 0.02
        b = jnp.zeros((1, dout), jnp.float32)
        return w, b

    raw = {}
    raw["tok_emb"] = jax.random.normal(
        next(keys), (VOCAB_SIZE, D_MODEL), jnp.float32) * 0.02
    raw["pos_emb"] = jax.random.normal(
        next(keys), (MAX_SEQ, D_MODEL), jnp.float32) * 0.02

    layers = []
    for _ in range(NUM_LAYERS):
        wq, bq = dense(next(keys), D_MODEL, D_MODEL)
        wk, bk = dense(next(keys), D_MODEL, D_MODEL)
        wv, bv = dense(next(keys), D_MODEL, D_MODEL)
        wo, bo = dense(next(keys), D_MODEL, D_MODEL)
        g1 = jnp.ones((1, D_MODEL), jnp.float32)
        be1 = jnp.zeros((1, D_MODEL), jnp.float32)
        w1, b1 = dense(next(keys), D_MODEL, DFF)
        w2, b2 = dense(next(keys), DFF, D_MODEL)
        g2 = jnp.ones((1, D_MODEL), jnp.float32)
        be2 = jnp.zeros((1, D_MODEL), jnp.float32)
        layers.append((wq, bq, wk, bk, wv, bv, wo, bo,
                       g1, be1, w1, b1, w2, b2, g2, be2))
    raw["layers"] = layers

    wc1, bc1 = dense(next(keys), D_MODEL, HIDDEN_SIZE)
    wc2, bc2 = dense(next(keys), HIDDEN_SIZE, NUM_CLASSES)
    ws1, bs1 = dense(next(keys), D_MODEL, HIDDEN_SIZE)
    ws2, bs2 = dense(next(keys), HIDDEN_SIZE, 1)
    raw["heads"] = (wc1, bc1, wc2, bc2, ws1, bs1, ws2, bs2)
    return raw


def pack_params(raw):
    """Stack per-layer weights on a leading L axis, cast matmul weights to bf16,
    and fuse the two heads into one concatenated / block-diagonal pair of mats."""
    bf = jnp.bfloat16
    layers = raw["layers"]

    def stack(i, dtype):
        return jnp.stack([lp[i] for lp in layers]).astype(dtype)

    stacked = [
        stack(0, bf), stack(1, jnp.float32),       # wq, bq
        stack(2, bf), stack(3, jnp.float32),       # wk, bk
        stack(4, bf), stack(5, jnp.float32),       # wv, bv
        stack(6, bf), stack(7, jnp.float32),       # wo, bo
        stack(8, jnp.float32), stack(9, jnp.float32),    # g1, be1
        stack(10, bf), stack(11, jnp.float32),     # w1, b1
        stack(12, bf), stack(13, jnp.float32),     # w2, b2
        stack(14, jnp.float32), stack(15, jnp.float32),  # g2, be2
    ]

    wc1, bc1, wc2, bc2, ws1, bs1, ws2, bs2 = raw["heads"]
    # first layers of both heads side by side: (D, 2*HIDDEN)
    wh1 = jnp.concatenate([wc1, ws1], axis=1).astype(bf)
    bh1 = jnp.concatenate([bc1, bs1], axis=1)
    # second layers block-diagonal, lane-padded to 128 output columns
    wh2 = jnp.zeros((2 * HIDDEN_SIZE, OUT_LANES), jnp.float32)
    wh2 = wh2.at[:HIDDEN_SIZE, :NUM_CLASSES].set(wc2)
    wh2 = wh2.at[HIDDEN_SIZE:, NUM_CLASSES:NUM_CLASSES + 1].set(ws2)
    bh2 = jnp.zeros((1, OUT_LANES), jnp.float32)
    bh2 = bh2.at[:, :NUM_CLASSES].set(bc2)
    bh2 = bh2.at[:, NUM_CLASSES:NUM_CLASSES + 1].set(bs2)
    stacked += [wh1, bh1, wh2.astype(bf), bh2]

    return {"tok_emb": raw["tok_emb"], "pos_emb": raw["pos_emb"],
            "stacked": tuple(stacked)}


# ----------------------------- main ------------------------------------------
if __name__ == "__main__":
    key = jax.random.PRNGKey(0)
    pkey, ikey = jax.random.split(key)

    params = pack_params(init_params(pkey))

    B, S = 2, 8
    input_ids = jax.random.randint(ikey, (B, S), 0, VOCAB_SIZE, jnp.int32)
    # mask out the last two tokens of the second example to exercise masking
    attention_mask = jnp.array(
        [[1, 1, 1, 1, 1, 1, 1, 1],
         [1, 1, 1, 1, 1, 1, 0, 0]], dtype=jnp.int32)

    cls_out, sent_out = jax.jit(multitask_forward)(
        params, input_ids, attention_mask)
    jax.block_until_ready((cls_out, sent_out))

    assert cls_out.shape == (B, NUM_CLASSES)
    assert sent_out.shape == (B, 1)
    assert bool(jnp.all(jnp.isfinite(cls_out)))
    assert bool(jnp.all((sent_out >= 0.0) & (sent_out <= 1.0)))
    print("KERNEL_OK")
</pallas_src>

<mosaic_0001>
module attributes {stable_mosaic.version = 11 : i64} {
  func.func @fused_forward_kernel(%arg0: i32, %arg1: memref<2x8x32xf32, #tpu.memory_space<vmem>>, %arg2: memref<2x8xf32, #tpu.memory_space<vmem>>, %arg3: memref<2x32x32xbf16, #tpu.memory_space<vmem>>, %arg4: memref<2x1x32xf32, #tpu.memory_space<vmem>>, %arg5: memref<2x32x32xbf16, #tpu.memory_space<vmem>>, %arg6: memref<2x1x32xf32, #tpu.memory_space<vmem>>, %arg7: memref<2x32x32xbf16, #tpu.memory_space<vmem>>, %arg8: memref<2x1x32xf32, #tpu.memory_space<vmem>>, %arg9: memref<2x32x32xbf16, #tpu.memory_space<vmem>>, %arg10: memref<2x1x32xf32, #tpu.memory_space<vmem>>, %arg11: memref<2x1x32xf32, #tpu.memory_space<vmem>>, %arg12: memref<2x1x32xf32, #tpu.memory_space<vmem>>, %arg13: memref<2x32x64xbf16, #tpu.memory_space<vmem>>, %arg14: memref<2x1x64xf32, #tpu.memory_space<vmem>>, %arg15: memref<2x64x32xbf16, #tpu.memory_space<vmem>>, %arg16: memref<2x1x32xf32, #tpu.memory_space<vmem>>, %arg17: memref<2x1x32xf32, #tpu.memory_space<vmem>>, %arg18: memref<2x1x32xf32, #tpu.memory_space<vmem>>, %arg19: memref<32x32xbf16, #tpu.memory_space<vmem>>, %arg20: memref<1x32xf32, #tpu.memory_space<vmem>>, %arg21: memref<32x128xbf16, #tpu.memory_space<vmem>>, %arg22: memref<1x128xf32, #tpu.memory_space<vmem>>, %arg23: memref<2x128xf32, #tpu.memory_space<vmem>>) attributes {dimension_semantics = [#tpu.dimension_semantics<arbitrary>], iteration_bounds = array<i64: 1>, scalar_prefetch = 0 : i64, scratch_operands = 0 : i64, tpu.core_type = #tpu.core_type<tc>, window_params = [{pipeline_mode = #tpu.pipeline_mode<synchronous>, transform_indices = @transform_0, window_bounds = array<i64: 2, 8, 32>}, {pipeline_mode = #tpu.pipeline_mode<synchronous>, transform_indices = @transform_1, window_bounds = array<i64: 2, 8>}, {pipeline_mode = #tpu.pipeline_mode<synchronous>, transform_indices = @transform_2, window_bounds = array<i64: 2, 32, 32>}, {pipeline_mode = #tpu.pipeline_mode<synchronous>, transform_indices = @transform_3, window_bounds = array<i64: 2, 1, 32>}, {pipeline_mode = #tpu.pipeline_mode<synchronous>, transform_indices = @transform_4, window_bounds = array<i64: 2, 32, 32>}, {pipeline_mode = #tpu.pipeline_mode<synchronous>, transform_indices = @transform_5, window_bounds = array<i64: 2, 1, 32>}, {pipeline_mode = #tpu.pipeline_mode<synchronous>, transform_indices = @transform_6, window_bounds = array<i64: 2, 32, 32>}, {pipeline_mode = #tpu.pipeline_mode<synchronous>, transform_indices = @transform_7, window_bounds = array<i64: 2, 1, 32>}, {pipeline_mode = #tpu.pipeline_mode<synchronous>, transform_indices = @transform_8, window_bounds = array<i64: 2, 32, 32>}, {pipeline_mode = #tpu.pipeline_mode<synchronous>, transform_indices = @transform_9, window_bounds = array<i64: 2, 1, 32>}, {pipeline_mode = #tpu.pipeline_mode<synchronous>, transform_indices = @transform_10, window_bounds = array<i64: 2, 1, 32>}, {pipeline_mode = #tpu.pipeline_mode<synchronous>, transform_indices = @transform_11, window_bounds = array<i64: 2, 1, 32>}, {pipeline_mode = #tpu.pipeline_mode<synchronous>, transform_indices = @transform_12, window_bounds = array<i64: 2, 32, 64>}, {pipeline_mode = #tpu.pipeline_mode<synchronous>, transform_indices = @transform_13, window_bounds = array<i64: 2, 1, 64>}, {pipeline_mode = #tpu.pipeline_mode<synchronous>, transform_indices = @transform_14, window_bounds = array<i64: 2, 64, 32>}, {pipeline_mode = #tpu.pipeline_mode<synchronous>, transform_indices = @transform_15, window_bounds = array<i64: 2, 1, 32>}, {pipeline_mode = #tpu.pipeline_mode<synchronous>, transform_indices = @transform_16, window_bounds = array<i64: 2, 1, 32>}, {pipeline_mode = #tpu.pipeline_mode<synchronous>, transform_indices = @transform_17, window_bounds = array<i64: 2, 1, 32>}, {pipeline_mode = #tpu.pipeline_mode<synchronous>, transform_indices = @transform_18, window_bounds = array<i64: 32, 32>}, {pipeline_mode = #tpu.pipeline_mode<synchronous>, transform_indices = @transform_19, window_bounds = array<i64: 1, 32>}, {pipeline_mode = #tpu.pipeline_mode<synchronous>, transform_indices = @transform_20, window_bounds = array<i64: 32, 128>}, {pipeline_mode = #tpu.pipeline_mode<synchronous>, transform_indices = @transform_21, window_bounds = array<i64: 1, 128>}, {pipeline_mode = #tpu.pipeline_mode<synchronous>, transform_indices = @transform_22, window_bounds = array<i64: 2, 128>}]} {
    %c0 = arith.constant 0 : index
    %c0_0 = arith.constant 0 : index
    %c0_1 = arith.constant 0 : index
    %0 = vector.load %arg1[%c0, %c0_0, %c0_1] : memref<2x8x32xf32, #tpu.memory_space<vmem>>, vector<2x8x32xf32>
    %c0_2 = arith.constant 0 : index
    %c0_3 = arith.constant 0 : index
    %1 = vector.load %arg2[%c0_2, %c0_3] : memref<2x8xf32, #tpu.memory_space<vmem>>, vector<2x8xf32>
    %cst = arith.constant 1.000000e+00 : f32
    %2 = vector.broadcast %cst : f32 to vector<2x8xf32>
    %3 = arith.subf %2, %1 : vector<2x8xf32>
    %cst_4 = arith.constant -1.000000e+09 : f32
    %4 = vector.broadcast %cst_4 : f32 to vector<2x8xf32>
    %5 = arith.mulf %3, %4 : vector<2x8xf32>
    %6 = vector.shape_cast %5 : vector<2x8xf32> to vector<2x1x8xf32>
    %7 = tpu.concatenate %6, %6, %6, %6 in 0 : vector<2x1x8xf32>, vector<2x1x8xf32>, vector<2x1x8xf32>, vector<2x1x8xf32> -> vector<8x1x8xf32>
    %8 = vector.shape_cast %0 : vector<2x8x32xf32> to vector<16x32xf32>
    %9 = arith.truncf %8 : vector<16x32xf32> to vector<16x32xbf16>
    %c0_5 = arith.constant 0 : index
    %c0_6 = arith.constant 0 : index
    %c0_7 = arith.constant 0 : index
    %10 = vector.load %arg3[%c0_5, %c0_6, %c0_7] : memref<2x32x32xbf16, #tpu.memory_space<vmem>>, vector<1x32x32xbf16>
    %11 = vector.shape_cast %10 : vector<1x32x32xbf16> to vector<32x32xbf16>
    %cst_8 = arith.constant dense<0.000000e+00> : vector<16x32xf32>
    %12 = tpu.matmul %9, %11, %cst_8 {dimension_numbers = #tpu.dot_dimension_numbers<[1], [0], [0], [1], [0, 0, 1, 1], [], []>} : vector<16x32xbf16>, vector<32x32xbf16>, vector<16x32xf32> -> vector<16x32xf32>
    %c0_9 = arith.constant 0 : index
    %c0_10 = arith.constant 0 : index
    %c0_11 = arith.constant 0 : index
    %13 = vector.load %arg4[%c0_9, %c0_10, %c0_11] : memref<2x1x32xf32, #tpu.memory_space<vmem>>, vector<1x1x32xf32>
    %14 = vector.shape_cast %13 : vector<1x1x32xf32> to vector<1x32xf32>
    %15 = vector.broadcast %14 : vector<1x32xf32> to vector<16x32xf32>
    %16 = arith.addf %12, %15 : vector<16x32xf32>
    %c0_12 = arith.constant 0 : index
    %c0_13 = arith.constant 0 : index
    %c0_14 = arith.constant 0 : index
    %17 = vector.load %arg5[%c0_12, %c0_13, %c0_14] : memref<2x32x32xbf16, #tpu.memory_space<vmem>>, vector<1x32x32xbf16>
    %18 = vector.shape_cast %17 : vector<1x32x32xbf16> to vector<32x32xbf16>
    %cst_15 = arith.constant dense<0.000000e+00> : vector<16x32xf32>
    %19 = tpu.matmul %9, %18, %cst_15 {dimension_numbers = #tpu.dot_dimension_numbers<[1], [0], [0], [1], [0, 0, 1, 1], [], []>} : vector<16x32xbf16>, vector<32x32xbf16>, vector<16x32xf32> -> vector<16x32xf32>
    %c0_16 = arith.constant 0 : index
    %c0_17 = arith.constant 0 : index
    %c0_18 = arith.constant 0 : index
    %20 = vector.load %arg6[%c0_16, %c0_17, %c0_18] : memref<2x1x32xf32, #tpu.memory_space<vmem>>, vector<1x1x32xf32>
    %21 = vector.shape_cast %20 : vector<1x1x32xf32> to vector<1x32xf32>
    %22 = vector.broadcast %21 : vector<1x32xf32> to vector<16x32xf32>
    %23 = arith.addf %19, %22 : vector<16x32xf32>
    %c0_19 = arith.constant 0 : index
    %c0_20 = arith.constant 0 : index
    %c0_21 = arith.constant 0 : index
    %24 = vector.load %arg7[%c0_19, %c0_20, %c0_21] : memref<2x32x32xbf16, #tpu.memory_space<vmem>>, vector<1x32x32xbf16>
    %25 = vector.shape_cast %24 : vector<1x32x32xbf16> to vector<32x32xbf16>
    %cst_22 = arith.constant dense<0.000000e+00> : vector<16x32xf32>
    %26 = tpu.matmul %9, %25, %cst_22 {dimension_numbers = #tpu.dot_dimension_numbers<[1], [0], [0], [1], [0, 0, 1, 1], [], []>} : vector<16x32xbf16>, vector<32x32xbf16>, vector<16x32xf32> -> vector<16x32xf32>
    %c0_23 = arith.constant 0 : index
    %c0_24 = arith.constant 0 : index
    %c0_25 = arith.constant 0 : index
    %27 = vector.load %arg8[%c0_23, %c0_24, %c0_25] : memref<2x1x32xf32, #tpu.memory_space<vmem>>, vector<1x1x32xf32>
    %28 = vector.shape_cast %27 : vector<1x1x32xf32> to vector<1x32xf32>
    %29 = vector.broadcast %28 : vector<1x32xf32> to vector<16x32xf32>
    %30 = arith.addf %26, %29 : vector<16x32xf32>
    %31 = vector.shape_cast %16 : vector<16x32xf32> to vector<2x8x32xf32>
    %32 = vector.extract_strided_slice %31 {offsets = [0, 0, 0], sizes = [2, 8, 8], strides = [1, 1, 1]} : vector<2x8x32xf32> to vector<2x8x8xf32>
    %33 = vector.extract_strided_slice %31 {offsets = [0, 0, 8], sizes = [2, 8, 8], strides = [1, 1, 1]} : vector<2x8x32xf32> to vector<2x8x8xf32>
    %34 = vector.extract_strided_slice %31 {offsets = [0, 0, 16], sizes = [2, 8, 8], strides = [1, 1, 1]} : vector<2x8x32xf32> to vector<2x8x8xf32>
    %35 = vector.extract_strided_slice %31 {offsets = [0, 0, 24], sizes = [2, 8, 8], strides = [1, 1, 1]} : vector<2x8x32xf32> to vector<2x8x8xf32>
    %36 = tpu.concatenate %32, %33, %34, %35 in 0 : vector<2x8x8xf32>, vector<2x8x8xf32>, vector<2x8x8xf32>, vector<2x8x8xf32> -> vector<8x8x8xf32>
    %37 = arith.truncf %36 : vector<8x8x8xf32> to vector<8x8x8xbf16>
    %38 = vector.shape_cast %23 : vector<16x32xf32> to vector<2x8x32xf32>
    %39 = vector.extract_strided_slice %38 {offsets = [0, 0, 0], sizes = [2, 8, 8], strides = [1, 1, 1]} : vector<2x8x32xf32> to vector<2x8x8xf32>
    %40 = vector.extract_strided_slice %38 {offsets = [0, 0, 8], sizes = [2, 8, 8], strides = [1, 1, 1]} : vector<2x8x32xf32> to vector<2x8x8xf32>
    %41 = vector.extract_strided_slice %38 {offsets = [0, 0, 16], sizes = [2, 8, 8], strides = [1, 1, 1]} : vector<2x8x32xf32> to vector<2x8x8xf32>
    %42 = vector.extract_strided_slice %38 {offsets = [0, 0, 24], sizes = [2, 8, 8], strides = [1, 1, 1]} : vector<2x8x32xf32> to vector<2x8x8xf32>
    %43 = tpu.concatenate %39, %40, %41, %42 in 0 : vector<2x8x8xf32>, vector<2x8x8xf32>, vector<2x8x8xf32>, vector<2x8x8xf32> -> vector<8x8x8xf32>
    %44 = arith.truncf %43 : vector<8x8x8xf32> to vector<8x8x8xbf16>
    %45 = vector.shape_cast %30 : vector<16x32xf32> to vector<2x8x32xf32>
    %46 = vector.extract_strided_slice %45 {offsets = [0, 0, 0], sizes = [2, 8, 8], strides = [1, 1, 1]} : vector<2x8x32xf32> to vector<2x8x8xf32>
    %47 = vector.extract_strided_slice %45 {offsets = [0, 0, 8], sizes = [2, 8, 8], strides = [1, 1, 1]} : vector<2x8x32xf32> to vector<2x8x8xf32>
    %48 = vector.extract_strided_slice %45 {offsets = [0, 0, 16], sizes = [2, 8, 8], strides = [1, 1, 1]} : vector<2x8x32xf32> to vector<2x8x8xf32>
    %49 = vector.extract_strided_slice %45 {offsets = [0, 0, 24], sizes = [2, 8, 8], strides = [1, 1, 1]} : vector<2x8x32xf32> to vector<2x8x8xf32>
    %50 = tpu.concatenate %46, %47, %48, %49 in 0 : vector<2x8x8xf32>, vector<2x8x8xf32>, vector<2x8x8xf32>, vector<2x8x8xf32> -> vector<8x8x8xf32>
    %51 = arith.truncf %50 : vector<8x8x8xf32> to vector<8x8x8xbf16>
    "tpu.trace_start"() <{level = 10 : i32, message = "bqd,bkd->bqk"}> : () -> ()
    %cst_26 = arith.constant dense<0.000000e+00> : vector<8x8x8xf32>
    %52 = tpu.matmul %37, %44, %cst_26 {dimension_numbers = #tpu.dot_dimension_numbers<[2], [2], [1], [1], [0, 0, 0, 1, 1, 1], [0], [0]>} : vector<8x8x8xbf16>, vector<8x8x8xbf16>, vector<8x8x8xf32> -> vector<8x8x8xf32>
    "tpu.trace_stop"() : () -> ()
    %cst_27 = arith.constant 0.353553385 : f32
    %53 = vector.broadcast %cst_27 : f32 to vector<8x8x8xf32>
    %54 = arith.mulf %52, %53 : vector<8x8x8xf32>
    %55 = vector.broadcast %7 : vector<8x1x8xf32> to vector<8x8x8xf32>
    %56 = arith.addf %54, %55 : vector<8x8x8xf32>
    %cst_28 = arith.constant dense<0xFF800000> : vector<8x8xf32>
    %57 = vector.multi_reduction <maximumf>, %56, %cst_28 [2] : vector<8x8x8xf32> to vector<8x8xf32>
    %58 = vector.shape_cast %57 : vector<8x8xf32> to vector<8x8x1xf32>
    %59 = vector.broadcast %58 : vector<8x8x1xf32> to vector<8x8x8xf32>
    %60 = arith.subf %56, %59 : vector<8x8x8xf32>
    %61 = math.exp %60 : vector<8x8x8xf32>
    %cst_29 = arith.constant dense<0.000000e+00> : vector<8x8xf32>
    %62 = vector.multi_reduction <add>, %61, %cst_29 [2] : vector<8x8x8xf32> to vector<8x8xf32>
    %63 = vector.shape_cast %62 : vector<8x8xf32> to vector<8x8x1xf32>
    %64 = tpu.reciprocal %63 {approx = true} : vector<8x8x1xf32> -> vector<8x8x1xf32>
    %65 = vector.broadcast %64 : vector<8x8x1xf32> to vector<8x8x8xf32>
    %66 = arith.mulf %61, %65 : vector<8x8x8xf32>
    %67 = arith.truncf %66 : vector<8x8x8xf32> to vector<8x8x8xbf16>
    "tpu.trace_start"() <{level = 10 : i32, message = "bqk,bkd->bqd"}> : () -> ()
    %cst_30 = arith.constant dense<0.000000e+00> : vector<8x8x8xf32>
    %68 = tpu.matmul %67, %51, %cst_30 {dimension_numbers = #tpu.dot_dimension_numbers<[2], [1], [1], [2], [0, 0, 0, 1, 1, 2], [0], [0]>} : vector<8x8x8xbf16>, vector<8x8x8xbf16>, vector<8x8x8xf32> -> vector<8x8x8xf32>
    "tpu.trace_stop"() : () -> ()
    %69 = vector.extract_strided_slice %68 {offsets = [0, 0, 0], sizes = [2, 8, 8], strides = [1, 1, 1]} : vector<8x8x8xf32> to vector<2x8x8xf32>
    %70 = vector.extract_strided_slice %68 {offsets = [2, 0, 0], sizes = [2, 8, 8], strides = [1, 1, 1]} : vector<8x8x8xf32> to vector<2x8x8xf32>
    %71 = vector.extract_strided_slice %68 {offsets = [4, 0, 0], sizes = [2, 8, 8], strides = [1, 1, 1]} : vector<8x8x8xf32> to vector<2x8x8xf32>
    %72 = vector.extract_strided_slice %68 {offsets = [6, 0, 0], sizes = [2, 8, 8], strides = [1, 1, 1]} : vector<8x8x8xf32> to vector<2x8x8xf32>
    %73 = tpu.concatenate %69, %70, %71, %72 in 2 : vector<2x8x8xf32>, vector<2x8x8xf32>, vector<2x8x8xf32>, vector<2x8x8xf32> -> vector<2x8x32xf32>
    %74 = vector.shape_cast %73 : vector<2x8x32xf32> to vector<16x32xf32>
    %75 = arith.truncf %74 : vector<16x32xf32> to vector<16x32xbf16>
    %c0_31 = arith.constant 0 : index
    %c0_32 = arith.constant 0 : index
    %c0_33 = arith.constant 0 : index
    %76 = vector.load %arg9[%c0_31, %c0_32, %c0_33] : memref<2x32x32xbf16, #tpu.memory_space<vmem>>, vector<1x32x32xbf16>
    %77 = vector.shape_cast %76 : vector<1x32x32xbf16> to vector<32x32xbf16>
    %cst_34 = arith.constant dense<0.000000e+00> : vector<16x32xf32>
    %78 = tpu.matmul %75, %77, %cst_34 {dimension_numbers = #tpu.dot_dimension_numbers<[1], [0], [0], [1], [0, 0, 1, 1], [], []>} : vector<16x32xbf16>, vector<32x32xbf16>, vector<16x32xf32> -> vector<16x32xf32>
    %c0_35 = arith.constant 0 : index
    %c0_36 = arith.constant 0 : index
    %c0_37 = arith.constant 0 : index
    %79 = vector.load %arg10[%c0_35, %c0_36, %c0_37] : memref<2x1x32xf32, #tpu.memory_space<vmem>>, vector<1x1x32xf32>
    %80 = vector.shape_cast %79 : vector<1x1x32xf32> to vector<1x32xf32>
    %81 = vector.broadcast %80 : vector<1x32xf32> to vector<16x32xf32>
    %82 = arith.addf %78, %81 : vector<16x32xf32>
    %83 = arith.addf %8, %82 : vector<16x32xf32>
    %c0_38 = arith.constant 0 : index
    %c0_39 = arith.constant 0 : index
    %c0_40 = arith.constant 0 : index
    %84 = vector.load %arg11[%c0_38, %c0_39, %c0_40] : memref<2x1x32xf32, #tpu.memory_space<vmem>>, vector<1x1x32xf32>
    %85 = vector.shape_cast %84 : vector<1x1x32xf32> to vector<1x32xf32>
    %c0_41 = arith.constant 0 : index
    %c0_42 = arith.constant 0 : index
    %c0_43 = arith.constant 0 : index
    %86 = vector.load %arg12[%c0_41, %c0_42, %c0_43] : memref<2x1x32xf32, #tpu.memory_space<vmem>>, vector<1x1x32xf32>
    %87 = vector.shape_cast %86 : vector<1x1x32xf32> to vector<1x32xf32>
    %cst_44 = arith.constant dense<0.000000e+00> : vector<16xf32>
    %88 = vector.multi_reduction <add>, %83, %cst_44 [1] : vector<16x32xf32> to vector<16xf32>
    %89 = vector.shape_cast %88 : vector<16xf32> to vector<16x1xf32>
    %cst_45 = arith.constant 3.200000e+01 : f32
    %90 = vector.broadcast %cst_45 : f32 to vector<16x1xf32>
    %91 = arith.divf %89, %90 : vector<16x1xf32>
    %92 = vector.broadcast %91 : vector<16x1xf32> to vector<16x32xf32>
    %93 = arith.subf %83, %92 : vector<16x32xf32>
    %94 = arith.mulf %93, %93 : vector<16x32xf32>
    %cst_46 = arith.constant dense<0.000000e+00> : vector<16xf32>
    %95 = vector.multi_reduction <add>, %94, %cst_46 [1] : vector<16x32xf32> to vector<16xf32>
    %96 = vector.shape_cast %95 : vector<16xf32> to vector<16x1xf32>
    %cst_47 = arith.constant 3.200000e+01 : f32
    %97 = vector.broadcast %cst_47 : f32 to vector<16x1xf32>
    %98 = arith.divf %96, %97 : vector<16x1xf32>
    %99 = vector.broadcast %91 : vector<16x1xf32> to vector<16x32xf32>
    %100 = arith.subf %83, %99 : vector<16x32xf32>
    %cst_48 = arith.constant 9.99999974E-6 : f32
    %101 = vector.broadcast %cst_48 : f32 to vector<16x1xf32>
    %102 = arith.addf %98, %101 : vector<16x1xf32>
    %103 = math.rsqrt %102 : vector<16x1xf32>
    %104 = vector.broadcast %103 : vector<16x1xf32> to vector<16x32xf32>
    %105 = arith.mulf %100, %104 : vector<16x32xf32>
    %106 = vector.broadcast %85 : vector<1x32xf32> to vector<16x32xf32>
    %107 = arith.mulf %105, %106 : vector<16x32xf32>
    %108 = vector.broadcast %87 : vector<1x32xf32> to vector<16x32xf32>
    %109 = arith.addf %107, %108 : vector<16x32xf32>
    %110 = arith.truncf %109 : vector<16x32xf32> to vector<16x32xbf16>
    %c0_49 = arith.constant 0 : index
    %c0_50 = arith.constant 0 : index
    %c0_51 = arith.constant 0 : index
    %111 = vector.load %arg13[%c0_49, %c0_50, %c0_51] : memref<2x32x64xbf16, #tpu.memory_space<vmem>>, vector<1x32x64xbf16>
    %112 = vector.shape_cast %111 : vector<1x32x64xbf16> to vector<32x64xbf16>
    %cst_52 = arith.constant dense<0.000000e+00> : vector<16x64xf32>
    %113 = tpu.matmul %110, %112, %cst_52 {dimension_numbers = #tpu.dot_dimension_numbers<[1], [0], [0], [1], [0, 0, 1, 1], [], []>} : vector<16x32xbf16>, vector<32x64xbf16>, vector<16x64xf32> -> vector<16x64xf32>
    %c0_53 = arith.constant 0 : index
    %c0_54 = arith.constant 0 : index
    %c0_55 = arith.constant 0 : index
    %114 = vector.load %arg14[%c0_53, %c0_54, %c0_55] : memref<2x1x64xf32, #tpu.memory_space<vmem>>, vector<1x1x64xf32>
    %115 = vector.shape_cast %114 : vector<1x1x64xf32> to vector<1x64xf32>
    %116 = vector.broadcast %115 : vector<1x64xf32> to vector<16x64xf32>
    %117 = arith.addf %113, %116 : vector<16x64xf32>
    %cst_56 = arith.constant 0.000000e+00 : f32
    %118 = vector.broadcast %cst_56 : f32 to vector<16x64xf32>
    %119 = arith.maximumf %117, %118 : vector<16x64xf32>
    %120 = arith.truncf %119 : vector<16x64xf32> to vector<16x64xbf16>
    %c0_57 = arith.constant 0 : index
    %c0_58 = arith.constant 0 : index
    %c0_59 = arith.constant 0 : index
    %121 = vector.load %arg15[%c0_57, %c0_58, %c0_59] : memref<2x64x32xbf16, #tpu.memory_space<vmem>>, vector<1x64x32xbf16>
    %122 = vector.shape_cast %121 : vector<1x64x32xbf16> to vector<64x32xbf16>
    %cst_60 = arith.constant dense<0.000000e+00> : vector<16x32xf32>
    %123 = tpu.matmul %120, %122, %cst_60 {dimension_numbers = #tpu.dot_dimension_numbers<[1], [0], [0], [1], [0, 0, 1, 1], [], []>} : vector<16x64xbf16>, vector<64x32xbf16>, vector<16x32xf32> -> vector<16x32xf32>
    %c0_61 = arith.constant 0 : index
    %c0_62 = arith.constant 0 : index
    %c0_63 = arith.constant 0 : index
    %124 = vector.load %arg16[%c0_61, %c0_62, %c0_63] : memref<2x1x32xf32, #tpu.memory_space<vmem>>, vector<1x1x32xf32>
    %125 = vector.shape_cast %124 : vector<1x1x32xf32> to vector<1x32xf32>
    %126 = vector.broadcast %125 : vector<1x32xf32> to vector<16x32xf32>
    %127 = arith.addf %123, %126 : vector<16x32xf32>
    %128 = arith.addf %109, %127 : vector<16x32xf32>
    %c0_64 = arith.constant 0 : index
    %c0_65 = arith.constant 0 : index
    %c0_66 = arith.constant 0 : index
    %129 = vector.load %arg17[%c0_64, %c0_65, %c0_66] : memref<2x1x32xf32, #tpu.memory_space<vmem>>, vector<1x1x32xf32>
    %130 = vector.shape_cast %129 : vector<1x1x32xf32> to vector<1x32xf32>
    %c0_67 = arith.constant 0 : index
    %c0_68 = arith.constant 0 : index
    %c0_69 = arith.constant 0 : index
    %131 = vector.load %arg18[%c0_67, %c0_68, %c0_69] : memref<2x1x32xf32, #tpu.memory_space<vmem>>, vector<1x1x32xf32>
    %132 = vector.shape_cast %131 : vector<1x1x32xf32> to vector<1x32xf32>
    %cst_70 = arith.constant dense<0.000000e+00> : vector<16xf32>
    %133 = vector.multi_reduction <add>, %128, %cst_70 [1] : vector<16x32xf32> to vector<16xf32>
    %134 = vector.shape_cast %133 : vector<16xf32> to vector<16x1xf32>
    %cst_71 = arith.constant 3.200000e+01 : f32
    %135 = vector.broadcast %cst_71 : f32 to vector<16x1xf32>
    %136 = arith.divf %134, %135 : vector<16x1xf32>
    %137 = vector.broadcast %136 : vector<16x1xf32> to vector<16x32xf32>
    %138 = arith.subf %128, %137 : vector<16x32xf32>
    %139 = arith.mulf %138, %138 : vector<16x32xf32>
    %cst_72 = arith.constant dense<0.000000e+00> : vector<16xf32>
    %140 = vector.multi_reduction <add>, %139, %cst_72 [1] : vector<16x32xf32> to vector<16xf32>
    %141 = vector.shape_cast %140 : vector<16xf32> to vector<16x1xf32>
    %cst_73 = arith.constant 3.200000e+01 : f32
    %142 = vector.broadcast %cst_73 : f32 to vector<16x1xf32>
    %143 = arith.divf %141, %142 : vector<16x1xf32>
    %144 = vector.broadcast %136 : vector<16x1xf32> to vector<16x32xf32>
    %145 = arith.subf %128, %144 : vector<16x32xf32>
    %cst_74 = arith.constant 9.99999974E-6 : f32
    %146 = vector.broadcast %cst_74 : f32 to vector<16x1xf32>
    %147 = arith.addf %143, %146 : vector<16x1xf32>
    %148 = math.rsqrt %147 : vector<16x1xf32>
    %149 = vector.broadcast %148 : vector<16x1xf32> to vector<16x32xf32>
    %150 = arith.mulf %145, %149 : vector<16x32xf32>
    %151 = vector.broadcast %130 : vector<1x32xf32> to vector<16x32xf32>
    %152 = arith.mulf %150, %151 : vector<16x32xf32>
    %153 = vector.broadcast %132 : vector<1x32xf32> to vector<16x32xf32>
    %154 = arith.addf %152, %153 : vector<16x32xf32>
    %155 = arith.truncf %154 : vector<16x32xf32> to vector<16x32xbf16>
    %c1 = arith.constant 1 : index
    %c0_75 = arith.constant 0 : index
    %c0_76 = arith.constant 0 : index
    %156 = vector.load %arg3[%c1, %c0_75, %c0_76] : memref<2x32x32xbf16, #tpu.memory_space<vmem>>, vector<1x32x32xbf16>
    %157 = vector.shape_cast %156 : vector<1x32x32xbf16> to vector<32x32xbf16>
    %cst_77 = arith.constant dense<0.000000e+00> : vector<16x32xf32>
    %158 = tpu.matmul %155, %157, %cst_77 {dimension_numbers = #tpu.dot_dimension_numbers<[1], [0], [0], [1], [0, 0, 1, 1], [], []>} : vector<16x32xbf16>, vector<32x32xbf16>, vector<16x32xf32> -> vector<16x32xf32>
    %c1_78 = arith.constant 1 : index
    %c0_79 = arith.constant 0 : index
    %c0_80 = arith.constant 0 : index
    %159 = vector.load %arg4[%c1_78, %c0_79, %c0_80] : memref<2x1x32xf32, #tpu.memory_space<vmem>>, vector<1x1x32xf32>
    %160 = vector.shape_cast %159 : vector<1x1x32xf32> to vector<1x32xf32>
    %161 = vector.broadcast %160 : vector<1x32xf32> to vector<16x32xf32>
    %162 = arith.addf %158, %161 : vector<16x32xf32>
    %c1_81 = arith.constant 1 : index
    %c0_82 = arith.constant 0 : index
    %c0_83 = arith.constant 0 : index
    %163 = vector.load %arg5[%c1_81, %c0_82, %c0_83] : memref<2x32x32xbf16, #tpu.memory_space<vmem>>, vector<1x32x32xbf16>
    %164 = vector.shape_cast %163 : vector<1x32x32xbf16> to vector<32x32xbf16>
    %cst_84 = arith.constant dense<0.000000e+00> : vector<16x32xf32>
    %165 = tpu.matmul %155, %164, %cst_84 {dimension_numbers = #tpu.dot_dimension_numbers<[1], [0], [0], [1], [0, 0, 1, 1], [], []>} : vector<16x32xbf16>, vector<32x32xbf16>, vector<16x32xf32> -> vector<16x32xf32>
    %c1_85 = arith.constant 1 : index
    %c0_86 = arith.constant 0 : index
    %c0_87 = arith.constant 0 : index
    %166 = vector.load %arg6[%c1_85, %c0_86, %c0_87] : memref<2x1x32xf32, #tpu.memory_space<vmem>>, vector<1x1x32xf32>
    %167 = vector.shape_cast %166 : vector<1x1x32xf32> to vector<1x32xf32>
    %168 = vector.broadcast %167 : vector<1x32xf32> to vector<16x32xf32>
    %169 = arith.addf %165, %168 : vector<16x32xf32>
    %c1_88 = arith.constant 1 : index
    %c0_89 = arith.constant 0 : index
    %c0_90 = arith.constant 0 : index
    %170 = vector.load %arg7[%c1_88, %c0_89, %c0_90] : memref<2x32x32xbf16, #tpu.memory_space<vmem>>, vector<1x32x32xbf16>
    %171 = vector.shape_cast %170 : vector<1x32x32xbf16> to vector<32x32xbf16>
    %cst_91 = arith.constant dense<0.000000e+00> : vector<16x32xf32>
    %172 = tpu.matmul %155, %171, %cst_91 {dimension_numbers = #tpu.dot_dimension_numbers<[1], [0], [0], [1], [0, 0, 1, 1], [], []>} : vector<16x32xbf16>, vector<32x32xbf16>, vector<16x32xf32> -> vector<16x32xf32>
    %c1_92 = arith.constant 1 : index
    %c0_93 = arith.constant 0 : index
    %c0_94 = arith.constant 0 : index
    %173 = vector.load %arg8[%c1_92, %c0_93, %c0_94] : memref<2x1x32xf32, #tpu.memory_space<vmem>>, vector<1x1x32xf32>
    %174 = vector.shape_cast %173 : vector<1x1x32xf32> to vector<1x32xf32>
    %175 = vector.broadcast %174 : vector<1x32xf32> to vector<16x32xf32>
    %176 = arith.addf %172, %175 : vector<16x32xf32>
    %177 = vector.shape_cast %162 : vector<16x32xf32> to vector<2x8x32xf32>
    %178 = vector.extract_strided_slice %177 {offsets = [0, 0, 0], sizes = [2, 8, 8], strides = [1, 1, 1]} : vector<2x8x32xf32> to vector<2x8x8xf32>
    %179 = vector.extract_strided_slice %177 {offsets = [0, 0, 8], sizes = [2, 8, 8], strides = [1, 1, 1]} : vector<2x8x32xf32> to vector<2x8x8xf32>
    %180 = vector.extract_strided_slice %177 {offsets = [0, 0, 16], sizes = [2, 8, 8], strides = [1, 1, 1]} : vector<2x8x32xf32> to vector<2x8x8xf32>
    %181 = vector.extract_strided_slice %177 {offsets = [0, 0, 24], sizes = [2, 8, 8], strides = [1, 1, 1]} : vector<2x8x32xf32> to vector<2x8x8xf32>
    %182 = tpu.concatenate %178, %179, %180, %181 in 0 : vector<2x8x8xf32>, vector<2x8x8xf32>, vector<2x8x8xf32>, vector<2x8x8xf32> -> vector<8x8x8xf32>
    %183 = arith.truncf %182 : vector<8x8x8xf32> to vector<8x8x8xbf16>
    %184 = vector.shape_cast %169 : vector<16x32xf32> to vector<2x8x32xf32>
    %185 = vector.extract_strided_slice %184 {offsets = [0, 0, 0], sizes = [2, 8, 8], strides = [1, 1, 1]} : vector<2x8x32xf32> to vector<2x8x8xf32>
    %186 = vector.extract_strided_slice %184 {offsets = [0, 0, 8], sizes = [2, 8, 8], strides = [1, 1, 1]} : vector<2x8x32xf32> to vector<2x8x8xf32>
    %187 = vector.extract_strided_slice %184 {offsets = [0, 0, 16], sizes = [2, 8, 8], strides = [1, 1, 1]} : vector<2x8x32xf32> to vector<2x8x8xf32>
    %188 = vector.extract_strided_slice %184 {offsets = [0, 0, 24], sizes = [2, 8, 8], strides = [1, 1, 1]} : vector<2x8x32xf32> to vector<2x8x8xf32>
    %189 = tpu.concatenate %185, %186, %187, %188 in 0 : vector<2x8x8xf32>, vector<2x8x8xf32>, vector<2x8x8xf32>, vector<2x8x8xf32> -> vector<8x8x8xf32>
    %190 = arith.truncf %189 : vector<8x8x8xf32> to vector<8x8x8xbf16>
    %191 = vector.shape_cast %176 : vector<16x32xf32> to vector<2x8x32xf32>
    %192 = vector.extract_strided_slice %191 {offsets = [0, 0, 0], sizes = [2, 8, 8], strides = [1, 1, 1]} : vector<2x8x32xf32> to vector<2x8x8xf32>
    %193 = vector.extract_strided_slice %191 {offsets = [0, 0, 8], sizes = [2, 8, 8], strides = [1, 1, 1]} : vector<2x8x32xf32> to vector<2x8x8xf32>
    %194 = vector.extract_strided_slice %191 {offsets = [0, 0, 16], sizes = [2, 8, 8], strides = [1, 1, 1]} : vector<2x8x32xf32> to vector<2x8x8xf32>
    %195 = vector.extract_strided_slice %191 {offsets = [0, 0, 24], sizes = [2, 8, 8], strides = [1, 1, 1]} : vector<2x8x32xf32> to vector<2x8x8xf32>
    %196 = tpu.concatenate %192, %193, %194, %195 in 0 : vector<2x8x8xf32>, vector<2x8x8xf32>, vector<2x8x8xf32>, vector<2x8x8xf32> -> vector<8x8x8xf32>
    %197 = arith.truncf %196 : vector<8x8x8xf32> to vector<8x8x8xbf16>
    "tpu.trace_start"() <{level = 10 : i32, message = "bqd,bkd->bqk"}> : () -> ()
    %cst_95 = arith.constant dense<0.000000e+00> : vector<8x8x8xf32>
    %198 = tpu.matmul %183, %190, %cst_95 {dimension_numbers = #tpu.dot_dimension_numbers<[2], [2], [1], [1], [0, 0, 0, 1, 1, 1], [0], [0]>} : vector<8x8x8xbf16>, vector<8x8x8xbf16>, vector<8x8x8xf32> -> vector<8x8x8xf32>
    "tpu.trace_stop"() : () -> ()
    %cst_96 = arith.constant 0.353553385 : f32
    %199 = vector.broadcast %cst_96 : f32 to vector<8x8x8xf32>
    %200 = arith.mulf %198, %199 : vector<8x8x8xf32>
    %201 = vector.broadcast %7 : vector<8x1x8xf32> to vector<8x8x8xf32>
    %202 = arith.addf %200, %201 : vector<8x8x8xf32>
    %cst_97 = arith.constant dense<0xFF800000> : vector<8x8xf32>
    %203 = vector.multi_reduction <maximumf>, %202, %cst_97 [2] : vector<8x8x8xf32> to vector<8x8xf32>
    %204 = vector.shape_cast %203 : vector<8x8xf32> to vector<8x8x1xf32>
    %205 = vector.broadcast %204 : vector<8x8x1xf32> to vector<8x8x8xf32>
    %206 = arith.subf %202, %205 : vector<8x8x8xf32>
    %207 = math.exp %206 : vector<8x8x8xf32>
    %cst_98 = arith.constant dense<0.000000e+00> : vector<8x8xf32>
    %208 = vector.multi_reduction <add>, %207, %cst_98 [2] : vector<8x8x8xf32> to vector<8x8xf32>
    %209 = vector.shape_cast %208 : vector<8x8xf32> to vector<8x8x1xf32>
    %210 = tpu.reciprocal %209 {approx = true} : vector<8x8x1xf32> -> vector<8x8x1xf32>
    %211 = vector.broadcast %210 : vector<8x8x1xf32> to vector<8x8x8xf32>
    %212 = arith.mulf %207, %211 : vector<8x8x8xf32>
    %213 = arith.truncf %212 : vector<8x8x8xf32> to vector<8x8x8xbf16>
    "tpu.trace_start"() <{level = 10 : i32, message = "bqk,bkd->bqd"}> : () -> ()
    %cst_99 = arith.constant dense<0.000000e+00> : vector<8x8x8xf32>
    %214 = tpu.matmul %213, %197, %cst_99 {dimension_numbers = #tpu.dot_dimension_numbers<[2], [1], [1], [2], [0, 0, 0, 1, 1, 2], [0], [0]>} : vector<8x8x8xbf16>, vector<8x8x8xbf16>, vector<8x8x8xf32> -> vector<8x8x8xf32>
    "tpu.trace_stop"() : () -> ()
    %215 = vector.extract_strided_slice %214 {offsets = [0, 0, 0], sizes = [2, 8, 8], strides = [1, 1, 1]} : vector<8x8x8xf32> to vector<2x8x8xf32>
    %216 = vector.extract_strided_slice %214 {offsets = [2, 0, 0], sizes = [2, 8, 8], strides = [1, 1, 1]} : vector<8x8x8xf32> to vector<2x8x8xf32>
    %217 = vector.extract_strided_slice %214 {offsets = [4, 0, 0], sizes = [2, 8, 8], strides = [1, 1, 1]} : vector<8x8x8xf32> to vector<2x8x8xf32>
    %218 = vector.extract_strided_slice %214 {offsets = [6, 0, 0], sizes = [2, 8, 8], strides = [1, 1, 1]} : vector<8x8x8xf32> to vector<2x8x8xf32>
    %219 = tpu.concatenate %215, %216, %217, %218 in 2 : vector<2x8x8xf32>, vector<2x8x8xf32>, vector<2x8x8xf32>, vector<2x8x8xf32> -> vector<2x8x32xf32>
    %220 = vector.shape_cast %219 : vector<2x8x32xf32> to vector<16x32xf32>
    %221 = arith.truncf %220 : vector<16x32xf32> to vector<16x32xbf16>
    %c1_100 = arith.constant 1 : index
    %c0_101 = arith.constant 0 : index
    %c0_102 = arith.constant 0 : index
    %222 = vector.load %arg9[%c1_100, %c0_101, %c0_102] : memref<2x32x32xbf16, #tpu.memory_space<vmem>>, vector<1x32x32xbf16>
    %223 = vector.shape_cast %222 : vector<1x32x32xbf16> to vector<32x32xbf16>
    %cst_103 = arith.constant dense<0.000000e+00> : vector<16x32xf32>
    %224 = tpu.matmul %221, %223, %cst_103 {dimension_numbers = #tpu.dot_dimension_numbers<[1], [0], [0], [1], [0, 0, 1, 1], [], []>} : vector<16x32xbf16>, vector<32x32xbf16>, vector<16x32xf32> -> vector<16x32xf32>
    %c1_104 = arith.constant 1 : index
    %c0_105 = arith.constant 0 : index
    %c0_106 = arith.constant 0 : index
    %225 = vector.load %arg10[%c1_104, %c0_105, %c0_106] : memref<2x1x32xf32, #tpu.memory_space<vmem>>, vector<1x1x32xf32>
    %226 = vector.shape_cast %225 : vector<1x1x32xf32> to vector<1x32xf32>
    %227 = vector.broadcast %226 : vector<1x32xf32> to vector<16x32xf32>
    %228 = arith.addf %224, %227 : vector<16x32xf32>
    %229 = arith.addf %154, %228 : vector<16x32xf32>
    %c1_107 = arith.constant 1 : index
    %c0_108 = arith.constant 0 : index
    %c0_109 = arith.constant 0 : index
    %230 = vector.load %arg11[%c1_107, %c0_108, %c0_109] : memref<2x1x32xf32, #tpu.memory_space<vmem>>, vector<1x1x32xf32>
    %231 = vector.shape_cast %230 : vector<1x1x32xf32> to vector<1x32xf32>
    %c1_110 = arith.constant 1 : index
    %c0_111 = arith.constant 0 : index
    %c0_112 = arith.constant 0 : index
    %232 = vector.load %arg12[%c1_110, %c0_111, %c0_112] : memref<2x1x32xf32, #tpu.memory_space<vmem>>, vector<1x1x32xf32>
    %233 = vector.shape_cast %232 : vector<1x1x32xf32> to vector<1x32xf32>
    %cst_113 = arith.constant dense<0.000000e+00> : vector<16xf32>
    %234 = vector.multi_reduction <add>, %229, %cst_113 [1] : vector<16x32xf32> to vector<16xf32>
    %235 = vector.shape_cast %234 : vector<16xf32> to vector<16x1xf32>
    %cst_114 = arith.constant 3.200000e+01 : f32
    %236 = vector.broadcast %cst_114 : f32 to vector<16x1xf32>
    %237 = arith.divf %235, %236 : vector<16x1xf32>
    %238 = vector.broadcast %237 : vector<16x1xf32> to vector<16x32xf32>
    %239 = arith.subf %229, %238 : vector<16x32xf32>
    %240 = arith.mulf %239, %239 : vector<16x32xf32>
    %cst_115 = arith.constant dense<0.000000e+00> : vector<16xf32>
    %241 = vector.multi_reduction <add>, %240, %cst_115 [1] : vector<16x32xf32> to vector<16xf32>
    %242 = vector.shape_cast %241 : vector<16xf32> to vector<16x1xf32>
    %cst_116 = arith.constant 3.200000e+01 : f32
    %243 = vector.broadcast %cst_116 : f32 to vector<16x1xf32>
    %244 = arith.divf %242, %243 : vector<16x1xf32>
    %245 = vector.broadcast %237 : vector<16x1xf32> to vector<16x32xf32>
    %246 = arith.subf %229, %245 : vector<16x32xf32>
    %cst_117 = arith.constant 9.99999974E-6 : f32
    %247 = vector.broadcast %cst_117 : f32 to vector<16x1xf32>
    %248 = arith.addf %244, %247 : vector<16x1xf32>
    %249 = math.rsqrt %248 : vector<16x1xf32>
    %250 = vector.broadcast %249 : vector<16x1xf32> to vector<16x32xf32>
    %251 = arith.mulf %246, %250 : vector<16x32xf32>
    %252 = vector.broadcast %231 : vector<1x32xf32> to vector<16x32xf32>
    %253 = arith.mulf %251, %252 : vector<16x32xf32>
    %254 = vector.broadcast %233 : vector<1x32xf32> to vector<16x32xf32>
    %255 = arith.addf %253, %254 : vector<16x32xf32>
    %256 = arith.truncf %255 : vector<16x32xf32> to vector<16x32xbf16>
    %c1_118 = arith.constant 1 : index
    %c0_119 = arith.constant 0 : index
    %c0_120 = arith.constant 0 : index
    %257 = vector.load %arg13[%c1_118, %c0_119, %c0_120] : memref<2x32x64xbf16, #tpu.memory_space<vmem>>, vector<1x32x64xbf16>
    %258 = vector.shape_cast %257 : vector<1x32x64xbf16> to vector<32x64xbf16>
    %cst_121 = arith.constant dense<0.000000e+00> : vector<16x64xf32>
    %259 = tpu.matmul %256, %258, %cst_121 {dimension_numbers = #tpu.dot_dimension_numbers<[1], [0], [0], [1], [0, 0, 1, 1], [], []>} : vector<16x32xbf16>, vector<32x64xbf16>, vector<16x64xf32> -> vector<16x64xf32>
    %c1_122 = arith.constant 1 : index
    %c0_123 = arith.constant 0 : index
    %c0_124 = arith.constant 0 : index
    %260 = vector.load %arg14[%c1_122, %c0_123, %c0_124] : memref<2x1x64xf32, #tpu.memory_space<vmem>>, vector<1x1x64xf32>
    %261 = vector.shape_cast %260 : vector<1x1x64xf32> to vector<1x64xf32>
    %262 = vector.broadcast %261 : vector<1x64xf32> to vector<16x64xf32>
    %263 = arith.addf %259, %262 : vector<16x64xf32>
    %cst_125 = arith.constant 0.000000e+00 : f32
    %264 = vector.broadcast %cst_125 : f32 to vector<16x64xf32>
    %265 = arith.maximumf %263, %264 : vector<16x64xf32>
    %266 = arith.truncf %265 : vector<16x64xf32> to vector<16x64xbf16>
    %c1_126 = arith.constant 1 : index
    %c0_127 = arith.constant 0 : index
    %c0_128 = arith.constant 0 : index
    %267 = vector.load %arg15[%c1_126, %c0_127, %c0_128] : memref<2x64x32xbf16, #tpu.memory_space<vmem>>, vector<1x64x32xbf16>
    %268 = vector.shape_cast %267 : vector<1x64x32xbf16> to vector<64x32xbf16>
    %cst_129 = arith.constant dense<0.000000e+00> : vector<16x32xf32>
    %269 = tpu.matmul %266, %268, %cst_129 {dimension_numbers = #tpu.dot_dimension_numbers<[1], [0], [0], [1], [0, 0, 1, 1], [], []>} : vector<16x64xbf16>, vector<64x32xbf16>, vector<16x32xf32> -> vector<16x32xf32>
    %c1_130 = arith.constant 1 : index
    %c0_131 = arith.constant 0 : index
    %c0_132 = arith.constant 0 : index
    %270 = vector.load %arg16[%c1_130, %c0_131, %c0_132] : memref<2x1x32xf32, #tpu.memory_space<vmem>>, vector<1x1x32xf32>
    %271 = vector.shape_cast %270 : vector<1x1x32xf32> to vector<1x32xf32>
    %272 = vector.broadcast %271 : vector<1x32xf32> to vector<16x32xf32>
    %273 = arith.addf %269, %272 : vector<16x32xf32>
    %274 = arith.addf %255, %273 : vector<16x32xf32>
    %c1_133 = arith.constant 1 : index
    %c0_134 = arith.constant 0 : index
    %c0_135 = arith.constant 0 : index
    %275 = vector.load %arg17[%c1_133, %c0_134, %c0_135] : memref<2x1x32xf32, #tpu.memory_space<vmem>>, vector<1x1x32xf32>
    %276 = vector.shape_cast %275 : vector<1x1x32xf32> to vector<1x32xf32>
    %c1_136 = arith.constant 1 : index
    %c0_137 = arith.constant 0 : index
    %c0_138 = arith.constant 0 : index
    %277 = vector.load %arg18[%c1_136, %c0_137, %c0_138] : memref<2x1x32xf32, #tpu.memory_space<vmem>>, vector<1x1x32xf32>
    %278 = vector.shape_cast %277 : vector<1x1x32xf32> to vector<1x32xf32>
    %cst_139 = arith.constant dense<0.000000e+00> : vector<16xf32>
    %279 = vector.multi_reduction <add>, %274, %cst_139 [1] : vector<16x32xf32> to vector<16xf32>
    %280 = vector.shape_cast %279 : vector<16xf32> to vector<16x1xf32>
    %cst_140 = arith.constant 3.200000e+01 : f32
    %281 = vector.broadcast %cst_140 : f32 to vector<16x1xf32>
    %282 = arith.divf %280, %281 : vector<16x1xf32>
    %283 = vector.broadcast %282 : vector<16x1xf32> to vector<16x32xf32>
    %284 = arith.subf %274, %283 : vector<16x32xf32>
    %285 = arith.mulf %284, %284 : vector<16x32xf32>
    %cst_141 = arith.constant dense<0.000000e+00> : vector<16xf32>
    %286 = vector.multi_reduction <add>, %285, %cst_141 [1] : vector<16x32xf32> to vector<16xf32>
    %287 = vector.shape_cast %286 : vector<16xf32> to vector<16x1xf32>
    %cst_142 = arith.constant 3.200000e+01 : f32
    %288 = vector.broadcast %cst_142 : f32 to vector<16x1xf32>
    %289 = arith.divf %287, %288 : vector<16x1xf32>
    %290 = vector.broadcast %282 : vector<16x1xf32> to vector<16x32xf32>
    %291 = arith.subf %274, %290 : vector<16x32xf32>
    %cst_143 = arith.constant 9.99999974E-6 : f32
    %292 = vector.broadcast %cst_143 : f32 to vector<16x1xf32>
    %293 = arith.addf %289, %292 : vector<16x1xf32>
    %294 = math.rsqrt %293 : vector<16x1xf32>
    %295 = vector.broadcast %294 : vector<16x1xf32> to vector<16x32xf32>
    %296 = arith.mulf %291, %295 : vector<16x32xf32>
    %297 = vector.broadcast %276 : vector<1x32xf32> to vector<16x32xf32>
    %298 = arith.mulf %296, %297 : vector<16x32xf32>
    %299 = vector.broadcast %278 : vector<1x32xf32> to vector<16x32xf32>
    %300 = arith.addf %298, %299 : vector<16x32xf32>
    %301 = vector.shape_cast %300 : vector<16x32xf32> to vector<2x8x32xf32>
    %302 = vector.shape_cast %1 : vector<2x8xf32> to vector<2x8x1xf32>
    %303 = vector.broadcast %302 : vector<2x8x1xf32> to vector<2x8x32xf32>
    %304 = arith.mulf %301, %303 : vector<2x8x32xf32>
    %cst_144 = arith.constant dense<0.000000e+00> : vector<2x32xf32>
    %305 = vector.multi_reduction <add>, %304, %cst_144 [1] : vector<2x8x32xf32> to vector<2x32xf32>
    %cst_145 = arith.constant dense<0.000000e+00> : vector<2xf32>
    %306 = vector.multi_reduction <add>, %1, %cst_145 [1] : vector<2x8xf32> to vector<2xf32>
    %307 = vector.shape_cast %306 : vector<2xf32> to vector<2x1xf32>
    %cst_146 = arith.constant 9.99999971E-10 : f32
    %308 = vector.broadcast %cst_146 : f32 to vector<2x1xf32>
    %309 = arith.maximumf %307, %308 : vector<2x1xf32>
    %310 = tpu.reciprocal %309 {approx = true} : vector<2x1xf32> -> vector<2x1xf32>
    %311 = vector.broadcast %310 : vector<2x1xf32> to vector<2x32xf32>
    %312 = arith.mulf %305, %311 : vector<2x32xf32>
    %313 = arith.truncf %312 : vector<2x32xf32> to vector<2x32xbf16>
    %c0_147 = arith.constant 0 : index
    %c0_148 = arith.constant 0 : index
    %314 = vector.load %arg19[%c0_147, %c0_148] : memref<32x32xbf16, #tpu.memory_space<vmem>>, vector<32x32xbf16>
    %cst_149 = arith.constant dense<0.000000e+00> : vector<2x32xf32>
    %315 = tpu.matmul %313, %314, %cst_149 {dimension_numbers = #tpu.dot_dimension_numbers<[1], [0], [0], [1], [0, 0, 1, 1], [], []>} : vector<2x32xbf16>, vector<32x32xbf16>, vector<2x32xf32> -> vector<2x32xf32>
    %c0_150 = arith.constant 0 : index
    %c0_151 = arith.constant 0 : index
    %316 = vector.load %arg20[%c0_150, %c0_151] : memref<1x32xf32, #tpu.memory_space<vmem>>, vector<1x32xf32>
    %317 = vector.broadcast %316 : vector<1x32xf32> to vector<2x32xf32>
    %318 = arith.addf %315, %317 : vector<2x32xf32>
    %cst_152 = arith.constant 0.000000e+00 : f32
    %319 = vector.broadcast %cst_152 : f32 to vector<2x32xf32>
    %320 = arith.maximumf %318, %319 : vector<2x32xf32>
    %321 = arith.truncf %320 : vector<2x32xf32> to vector<2x32xbf16>
    %c0_153 = arith.constant 0 : index
    %c0_154 = arith.constant 0 : index
    %322 = vector.load %arg21[%c0_153, %c0_154] : memref<32x128xbf16, #tpu.memory_space<vmem>>, vector<32x128xbf16>
    %cst_155 = arith.constant dense<0.000000e+00> : vector<2x128xf32>
    %323 = tpu.matmul %321, %322, %cst_155 {dimension_numbers = #tpu.dot_dimension_numbers<[1], [0], [0], [1], [0, 0, 1, 1], [], []>} : vector<2x32xbf16>, vector<32x128xbf16>, vector<2x128xf32> -> vector<2x128xf32>
    %c0_156 = arith.constant 0 : index
    %c0_157 = arith.constant 0 : index
    %324 = vector.load %arg22[%c0_156, %c0_157] : memref<1x128xf32, #tpu.memory_space<vmem>>, vector<1x128xf32>
    %325 = vector.broadcast %324 : vector<1x128xf32> to vector<2x128xf32>
    %326 = arith.addf %323, %325 : vector<2x128xf32>
    %327 = tpu.iota {dimensions = array<i32: 1>} : vector<2x128xi32>
    %cst_158 = arith.constant 0.000000e+00 : f32
    %328 = vector.broadcast %cst_158 : f32 to vector<2x128xf32>
    %329 = arith.subf %328, %326 : vector<2x128xf32>
    %330 = math.exp %329 : vector<2x128xf32>
    %cst_159 = arith.constant 1.000000e+00 : f32
    %331 = vector.broadcast %cst_159 : f32 to vector<2x128xf32>
    %332 = arith.addf %331, %330 : vector<2x128xf32>
    %cst_160 = arith.constant 1.000000e+00 : f32
    %333 = vector.broadcast %cst_160 : f32 to vector<2x128xf32>
    %334 = arith.divf %333, %332 : vector<2x128xf32>
    %c2_i32 = arith.constant 2 : i32
    %335 = vector.broadcast %c2_i32 : i32 to vector<2x128xi32>
    %336 = arith.cmpi eq, %327, %335 : vector<2x128xi32>
    %337 = arith.select %336, %334, %326 : vector<2x128xi1>, vector<2x128xf32>
    %c0_161 = arith.constant 0 : index
    %c0_162 = arith.constant 0 : index
    %338 = vector.load %arg23[%c0_161, %c0_162] : memref<2x128xf32, #tpu.memory_space<vmem>>, vector<2x128xf32>
    tpu.vector_store %arg23[%c0_161, %c0_162], %337 {strides = array<i32>} : memref<2x128xf32, #tpu.memory_space<vmem>>, vector<2x128xf32>,
    return
  }
  func.func @transform_0(%arg0: i32) -> (i32, i32, i32) {
    %c0_i32 = arith.constant 0 : i32
    %c0_i32_0 = arith.constant 0 : i32
    %c0_i32_1 = arith.constant 0 : i32
    %c0_i32_2 = arith.constant 0 : i32
    return %c0_i32, %c0_i32_0, %c0_i32_1 : i32, i32, i32
  }
  func.func @transform_1(%arg0: i32) -> (i32, i32) {
    %c0_i32 = arith.constant 0 : i32
    %c0_i32_0 = arith.constant 0 : i32
    %c0_i32_1 = arith.constant 0 : i32
    return %c0_i32, %c0_i32_0 : i32, i32
  }
  func.func @transform_2(%arg0: i32) -> (i32, i32, i32) {
    %c0_i32 = arith.constant 0 : i32
    %c0_i32_0 = arith.constant 0 : i32
    %c0_i32_1 = arith.constant 0 : i32
    %c0_i32_2 = arith.constant 0 : i32
    return %c0_i32, %c0_i32_0, %c0_i32_1 : i32, i32, i32
  }
  func.func @transform_3(%arg0: i32) -> (i32, i32, i32) {
    %c0_i32 = arith.constant 0 : i32
    %c0_i32_0 = arith.constant 0 : i32
    %c0_i32_1 = arith.constant 0 : i32
    %c0_i32_2 = arith.constant 0 : i32
    return %c0_i32, %c0_i32_0, %c0_i32_1 : i32, i32, i32
  }
  func.func @transform_4(%arg0: i32) -> (i32, i32, i32) {
    %c0_i32 = arith.constant 0 : i32
    %c0_i32_0 = arith.constant 0 : i32
    %c0_i32_1 = arith.constant 0 : i32
    %c0_i32_2 = arith.constant 0 : i32
    return %c0_i32, %c0_i32_0, %c0_i32_1 : i32, i32, i32
  }
  func.func @transform_5(%arg0: i32) -> (i32, i32, i32) {
    %c0_i32 = arith.constant 0 : i32
    %c0_i32_0 = arith.constant 0 : i32
    %c0_i32_1 = arith.constant 0 : i32
    %c0_i32_2 = arith.constant 0 : i32
    return %c0_i32, %c0_i32_0, %c0_i32_1 : i32, i32, i32
  }
  func.func @transform_6(%arg0: i32) -> (i32, i32, i32) {
    %c0_i32 = arith.constant 0 : i32
    %c0_i32_0 = arith.constant 0 : i32
    %c0_i32_1 = arith.constant 0 : i32
    %c0_i32_2 = arith.constant 0 : i32
    return %c0_i32, %c0_i32_0, %c0_i32_1 : i32, i32, i32
  }
  func.func @transform_7(%arg0: i32) -> (i32, i32, i32) {
    %c0_i32 = arith.constant 0 : i32
    %c0_i32_0 = arith.constant 0 : i32
    %c0_i32_1 = arith.constant 0 : i32
    %c0_i32_2 = arith.constant 0 : i32
    return %c0_i32, %c0_i32_0, %c0_i32_1 : i32, i32, i32
  }
  func.func @transform_8(%arg0: i32) -> (i32, i32, i32) {
    %c0_i32 = arith.constant 0 : i32
    %c0_i32_0 = arith.constant 0 : i32
    %c0_i32_1 = arith.constant 0 : i32
    %c0_i32_2 = arith.constant 0 : i32
    return %c0_i32, %c0_i32_0, %c0_i32_1 : i32, i32, i32
  }
  func.func @transform_9(%arg0: i32) -> (i32, i32, i32) {
    %c0_i32 = arith.constant 0 : i32
    %c0_i32_0 = arith.constant 0 : i32
    %c0_i32_1 = arith.constant 0 : i32
    %c0_i32_2 = arith.constant 0 : i32
    return %c0_i32, %c0_i32_0, %c0_i32_1 : i32, i32, i32
  }
  func.func @transform_10(%arg0: i32) -> (i32, i32, i32) {
    %c0_i32 = arith.constant 0 : i32
    %c0_i32_0 = arith.constant 0 : i32
    %c0_i32_1 = arith.constant 0 : i32
    %c0_i32_2 = arith.constant 0 : i32
    return %c0_i32, %c0_i32_0, %c0_i32_1 : i32, i32, i32
  }
  func.func @transform_11(%arg0: i32) -> (i32, i32, i32) {
    %c0_i32 = arith.constant 0 : i32
    %c0_i32_0 = arith.constant 0 : i32
    %c0_i32_1 = arith.constant 0 : i32
    %c0_i32_2 = arith.constant 0 : i32
    return %c0_i32, %c0_i32_0, %c0_i32_1 : i32, i32, i32
  }
  func.func @transform_12(%arg0: i32) -> (i32, i32, i32) {
    %c0_i32 = arith.constant 0 : i32
    %c0_i32_0 = arith.constant 0 : i32
    %c0_i32_1 = arith.constant 0 : i32
    %c0_i32_2 = arith.constant 0 : i32
    return %c0_i32, %c0_i32_0, %c0_i32_1 : i32, i32, i32
  }
  func.func @transform_13(%arg0: i32) -> (i32, i32, i32) {
    %c0_i32 = arith.constant 0 : i32
    %c0_i32_0 = arith.constant 0 : i32
    %c0_i32_1 = arith.constant 0 : i32
    %c0_i32_2 = arith.constant 0 : i32
    return %c0_i32, %c0_i32_0, %c0_i32_1 : i32, i32, i32
  }
  func.func @transform_14(%arg0: i32) -> (i32, i32, i32) {
    %c0_i32 = arith.constant 0 : i32
    %c0_i32_0 = arith.constant 0 : i32
    %c0_i32_1 = arith.constant 0 : i32
    %c0_i32_2 = arith.constant 0 : i32
    return %c0_i32, %c0_i32_0, %c0_i32_1 : i32, i32, i32
  }
  func.func @transform_15(%arg0: i32) -> (i32, i32, i32) {
    %c0_i32 = arith.constant 0 : i32
    %c0_i32_0 = arith.constant 0 : i32
    %c0_i32_1 = arith.constant 0 : i32
    %c0_i32_2 = arith.constant 0 : i32
    return %c0_i32, %c0_i32_0, %c0_i32_1 : i32, i32, i32
  }
  func.func @transform_16(%arg0: i32) -> (i32, i32, i32) {
    %c0_i32 = arith.constant 0 : i32
    %c0_i32_0 = arith.constant 0 : i32
    %c0_i32_1 = arith.constant 0 : i32
    %c0_i32_2 = arith.constant 0 : i32
    return %c0_i32, %c0_i32_0, %c0_i32_1 : i32, i32, i32
  }
  func.func @transform_17(%arg0: i32) -> (i32, i32, i32) {
    %c0_i32 = arith.constant 0 : i32
    %c0_i32_0 = arith.constant 0 : i32
    %c0_i32_1 = arith.constant 0 : i32
    %c0_i32_2 = arith.constant 0 : i32
    return %c0_i32, %c0_i32_0, %c0_i32_1 : i32, i32, i32
  }
  func.func @transform_18(%arg0: i32) -> (i32, i32) {
    %c0_i32 = arith.constant 0 : i32
    %c0_i32_0 = arith.constant 0 : i32
    %c0_i32_1 = arith.constant 0 : i32
    return %c0_i32, %c0_i32_0 : i32, i32
  }
  func.func @transform_19(%arg0: i32) -> (i32, i32) {
    %c0_i32 = arith.constant 0 : i32
    %c0_i32_0 = arith.constant 0 : i32
    %c0_i32_1 = arith.constant 0 : i32
    return %c0_i32, %c0_i32_0 : i32, i32
  }
  func.func @transform_20(%arg0: i32) -> (i32, i32) {
    %c0_i32 = arith.constant 0 : i32
    %c0_i32_0 = arith.constant 0 : i32
    %c0_i32_1 = arith.constant 0 : i32
    return %c0_i32, %c0_i32_0 : i32, i32
  }
  func.func @transform_21(%arg0: i32) -> (i32, i32) {
    %c0_i32 = arith.constant 0 : i32
    %c0_i32_0 = arith.constant 0 : i32
    %c0_i32_1 = arith.constant 0 : i32
    return %c0_i32, %c0_i32_0 : i32, i32
  }
  func.func @transform_22(%arg0: i32) -> (i32, i32) {
    %c0_i32 = arith.constant 0 : i32
    %c0_i32_0 = arith.constant 0 : i32
    %c0_i32_1 = arith.constant 0 : i32
    return %c0_i32, %c0_i32_0 : i32, i32
  }
}

</mosaic_0001>

<llo_original>
// kernel: multitask_forward.1
$region0: #{multitask_forward.1}
  #allocation0 [shape = 'u32[]', space=smem, size = 0x4, offset = 0x4, fixed_abs, tag = 'smem constant byte address 0x4 - core index']
  #allocation1 [shape = 'u32[72,128]{1,0:T(1,128)}', space=vmem, size = 0x9000, scoped, tag = 'internal scratch']
  %s0 = inlined_call_operand.vmem [shape: f32[2,8,32], index: 0, kind: input, shape index: {}]
  %s1 = inlined_call_operand.vmem [shape: f32[2,8], index: 1, kind: input, shape index: {}]
  %s2 = inlined_call_operand.vmem [shape: bf16[2,32,32], index: 2, kind: input, shape index: {}]
  %s3 = inlined_call_operand.vmem [shape: f32[2,1,32], index: 3, kind: input, shape index: {}]
  %s4 = inlined_call_operand.vmem [shape: bf16[2,32,32], index: 4, kind: input, shape index: {}]
  %s5 = inlined_call_operand.vmem [shape: f32[2,1,32], index: 5, kind: input, shape index: {}]
  %s6 = inlined_call_operand.vmem [shape: bf16[2,32,32], index: 6, kind: input, shape index: {}]
  %s7 = inlined_call_operand.vmem [shape: f32[2,1,32], index: 7, kind: input, shape index: {}]
  %s8 = inlined_call_operand.vmem [shape: bf16[2,32,32], index: 8, kind: input, shape index: {}]
  %s9 = inlined_call_operand.vmem [shape: f32[2,1,32], index: 9, kind: input, shape index: {}]
  %s10 = inlined_call_operand.vmem [shape: f32[2,1,32], index: 10, kind: input, shape index: {}]
  %s11 = inlined_call_operand.vmem [shape: f32[2,1,32], index: 11, kind: input, shape index: {}]
  %s12 = inlined_call_operand.vmem [shape: bf16[2,32,64], index: 12, kind: input, shape index: {}]
  %s13 = inlined_call_operand.vmem [shape: f32[2,1,64], index: 13, kind: input, shape index: {}]
  %s14 = inlined_call_operand.vmem [shape: bf16[2,64,32], index: 14, kind: input, shape index: {}]
  %s15 = inlined_call_operand.vmem [shape: f32[2,1,32], index: 15, kind: input, shape index: {}]
  %s16 = inlined_call_operand.vmem [shape: f32[2,1,32], index: 16, kind: input, shape index: {}]
  %s17 = inlined_call_operand.vmem [shape: f32[2,1,32], index: 17, kind: input, shape index: {}]
  %s18 = inlined_call_operand.vmem [shape: bf16[32,32], index: 18, kind: input, shape index: {}]
  %s19 = inlined_call_operand.vmem [shape: f32[1,32], index: 19, kind: input, shape index: {}]
  %s20 = inlined_call_operand.vmem [shape: bf16[32,128], index: 20, kind: input, shape index: {}]
  %s21 = inlined_call_operand.vmem [shape: f32[1,128], index: 21, kind: input, shape index: {}]
  %s22 = inlined_call_operand.vmem [shape: f32[2,128], index: 22, kind: output, shape index: {}]
  %s23 = sld [smem:[#allocation0]]
  $region98: #{multitask_forward.1} parent=0
    _
  %s25 = ssub.s32 1, %s23
  %s26 = scalar_select 0, %s25, %s23
  // Predicated region
  $region2: #{multitask_forward.1} parent=0 // pred_check
    _
  $region3: #{multitask_forward.1} parent=0 // pred_check_branch
    %28 = sbr.rel (0) target = $region5
  $region4: #{multitask_forward.1} parent=0 // pred_region
    _
  $region5: #{multitask_forward.1} parent=0 // pred_fallthru
    _
  // Predicated region
  $region6: #{multitask_forward.1} parent=0 // pred_check
    _
  $region7: #{multitask_forward.1} parent=0 // pred_check_branch
    %30 = sbr.rel (0) target = $region9
  $region8: #{multitask_forward.1} parent=0 // pred_region
    _
  $region9: #{multitask_forward.1} parent=0 // pred_fallthru
    _
  // Predicated region
  $region10: #{multitask_forward.1} parent=0 // pred_check
    _
  $region11: #{multitask_forward.1} parent=0 // pred_check_branch
    %32 = sbr.rel (0) target = $region13
  $region12: #{multitask_forward.1} parent=0 // pred_region
    _
  $region13: #{multitask_forward.1} parent=0 // pred_fallthru
    _
  // Predicated region
  $region14: #{multitask_forward.1} parent=0 // pred_check
    _
  $region15: #{multitask_forward.1} parent=0 // pred_check_branch
    %34 = sbr.rel (0) target = $region17
  $region16: #{multitask_forward.1} parent=0 // pred_region
    _
  $region17: #{multitask_forward.1} parent=0 // pred_fallthru
    _
  // Predicated region
  $region18: #{multitask_forward.1} parent=0 // pred_check
    _
  $region19: #{multitask_forward.1} parent=0 // pred_check_branch
    %36 = sbr.rel (0) target = $region21
  $region20: #{multitask_forward.1} parent=0 // pred_region
    _
  $region21: #{multitask_forward.1} parent=0 // pred_fallthru
    _
  // Predicated region
  $region22: #{multitask_forward.1} parent=0 // pred_check
    _
  $region23: #{multitask_forward.1} parent=0 // pred_check_branch
    %38 = sbr.rel (0) target = $region25
  $region24: #{multitask_forward.1} parent=0 // pred_region
    _
  $region25: #{multitask_forward.1} parent=0 // pred_fallthru
    _
  // Predicated region
  $region26: #{multitask_forward.1} parent=0 // pred_check
    _
  $region27: #{multitask_forward.1} parent=0 // pred_check_branch
    %40 = sbr.rel (0) target = $region29
  $region28: #{multitask_forward.1} parent=0 // pred_region
    _
  $region29: #{multitask_forward.1} parent=0 // pred_fallthru
    _
  // Predicated region
  $region30: #{multitask_forward.1} parent=0 // pred_check
    _
  $region31: #{multitask_forward.1} parent=0 // pred_check_branch
    %42 = sbr.rel (0) target = $region33
  $region32: #{multitask_forward.1} parent=0 // pred_region
    _
  $region33: #{multitask_forward.1} parent=0 // pred_fallthru
    _
  // Predicated region
  $region34: #{multitask_forward.1} parent=0 // pred_check
    _
  $region35: #{multitask_forward.1} parent=0 // pred_check_branch
    %44 = sbr.rel (0) target = $region37
  $region36: #{multitask_forward.1} parent=0 // pred_region
    _
  $region37: #{multitask_forward.1} parent=0 // pred_fallthru
    _
  // Predicated region
  $region38: #{multitask_forward.1} parent=0 // pred_check
    _
  $region39: #{multitask_forward.1} parent=0 // pred_check_branch
    %46 = sbr.rel (0) target = $region41
  $region40: #{multitask_forward.1} parent=0 // pred_region
    _
  $region41: #{multitask_forward.1} parent=0 // pred_fallthru
    _
  // Predicated region
  $region42: #{multitask_forward.1} parent=0 // pred_check
    _
  $region43: #{multitask_forward.1} parent=0 // pred_check_branch
    %48 = sbr.rel (0) target = $region45
  $region44: #{multitask_forward.1} parent=0 // pred_region
    _
  $region45: #{multitask_forward.1} parent=0 // pred_fallthru
    _
  // Predicated region
  $region46: #{multitask_forward.1} parent=0 // pred_check
    _
  $region47: #{multitask_forward.1} parent=0 // pred_check_branch
    %50 = sbr.rel (0) target = $region49
  $region48: #{multitask_forward.1} parent=0 // pred_region
    _
  $region49: #{multitask_forward.1} parent=0 // pred_fallthru
    _
  // Predicated region
  $region50: #{multitask_forward.1} parent=0 // pred_check
    _
  $region51: #{multitask_forward.1} parent=0 // pred_check_branch
    %52 = sbr.rel (0) target = $region53
  $region52: #{multitask_forward.1} parent=0 // pred_region
    _
  $region53: #{multitask_forward.1} parent=0 // pred_fallthru
    _
  // Predicated region
  $region54: #{multitask_forward.1} parent=0 // pred_check
    _
  $region55: #{multitask_forward.1} parent=0 // pred_check_branch
    %54 = sbr.rel (0) target = $region57
  $region56: #{multitask_forward.1} parent=0 // pred_region
    _
  $region57: #{multitask_forward.1} parent=0 // pred_fallthru
    _
  // Predicated region
  $region58: #{multitask_forward.1} parent=0 // pred_check
    _
  $region59: #{multitask_forward.1} parent=0 // pred_check_branch
    %56 = sbr.rel (0) target = $region61
  $region60: #{multitask_forward.1} parent=0 // pred_region
    _
  $region61: #{multitask_forward.1} parent=0 // pred_fallthru
    _
  // Predicated region
  $region62: #{multitask_forward.1} parent=0 // pred_check
    _
  $region63: #{multitask_forward.1} parent=0 // pred_check_branch
    %58 = sbr.rel (0) target = $region65
  $region64: #{multitask_forward.1} parent=0 // pred_region
    _
  $region65: #{multitask_forward.1} parent=0 // pred_fallthru
    _
  // Predicated region
  $region66: #{multitask_forward.1} parent=0 // pred_check
    _
  $region67: #{multitask_forward.1} parent=0 // pred_check_branch
    %60 = sbr.rel (0) target = $region69
  $region68: #{multitask_forward.1} parent=0 // pred_region
    _
  $region69: #{multitask_forward.1} parent=0 // pred_fallthru
    _
  // Predicated region
  $region70: #{multitask_forward.1} parent=0 // pred_check
    _
  $region71: #{multitask_forward.1} parent=0 // pred_check_branch
    %62 = sbr.rel (0) target = $region73
  $region72: #{multitask_forward.1} parent=0 // pred_region
    _
  $region73: #{multitask_forward.1} parent=0 // pred_fallthru
    _
  // Predicated region
  $region74: #{multitask_forward.1} parent=0 // pred_check
    _
  $region75: #{multitask_forward.1} parent=0 // pred_check_branch
    %64 = sbr.rel (0) target = $region77
  $region76: #{multitask_forward.1} parent=0 // pred_region
    _
  $region77: #{multitask_forward.1} parent=0 // pred_fallthru
    _
  // Predicated region
  $region78: #{multitask_forward.1} parent=0 // pred_check
    _
  $region79: #{multitask_forward.1} parent=0 // pred_check_branch
    %66 = sbr.rel (0) target = $region81
  $region80: #{multitask_forward.1} parent=0 // pred_region
    _
  $region81: #{multitask_forward.1} parent=0 // pred_fallthru
    _
  // Predicated region
  $region82: #{multitask_forward.1} parent=0 // pred_check
    _
  $region83: #{multitask_forward.1} parent=0 // pred_check_branch
    %68 = sbr.rel (0) target = $region85
  $region84: #{multitask_forward.1} parent=0 // pred_region
    _
  $region85: #{multitask_forward.1} parent=0 // pred_fallthru
    _
  // Predicated region
  $region86: #{multitask_forward.1} parent=0 // pred_check
    _
  $region87: #{multitask_forward.1} parent=0 // pred_check_branch
    %70 = sbr.rel (0) target = $region89
  $region88: #{multitask_forward.1} parent=0 // pred_region
    _
  $region89: #{multitask_forward.1} parent=0 // pred_fallthru
    _
  %v72 = vld [vmem:[%s0] sm:$0xff]
  %v73 = vld [vmem:[%s0 + $0x8] sm:$0xff]
  %v74 = vld [vmem:[%s1] sm:$0x3]
  %v75 = vsub.f32 1.0, %v74
  %v76 = vmul.f32 %v75, -1e+09
  %v78 = vrot.slane %v76, 1
  %v79 = vpack.c.bf16 %v73, %v72
  %v80 = vld [vmem:[%s2] sm:$0xf]
  %v81 = vld [vmem:[%s2 + $0x4] sm:$0xf]
  %v82 = vld [vmem:[%s2 + $0x8] sm:$0xf]
  %v83 = vld [vmem:[%s2 + $0xc] sm:$0xf]
  %v84 = vld [vmem:[%s3] sm:$0x1]
  %v86 = vperm.slane %v84, 0
  %v92 = vunpack.c.l.b16 %v80
  %v93 = vunpack.c.l.b16 %v81
  %v94 = vunpack.c.l.b16 %v82
  %v95 = vunpack.c.l.b16 %v83
  %v96 = vpack.c.b16 %v93, %v92
  %v97 = vpack.c.b16 %v95, %v94
  %vm100 = vcmask 261120
  %v102 = vsel %vm100, %v79, 0
  %104 = vmatpush.bf16.msra.mxu0 0
  %105 = vmatpush.bf16.msra.mxu0 0
  %106 = vmatpush.bf16.msra.mxu0 0
  %107 = vmatpush.bf16.msra.mxu0 0
  %108 = vmatpush.bf16.msra.mxu0 0
  %109 = vmatpush.bf16.msra.mxu0 0
  %110 = vmatpush.bf16.msra.mxu0 %v97
  %111 = vmatpush.bf16.msra.mxu0 %v96
  %112 = vmatmul.bf16.gmra.mxu0 %v102
  %v113 = vpop.f32.mrf.mxu0
  %v114 = vadd.f32 %v86, %v113
  %v115 = vpop.f32.mrf.mxu0
  %v116 = vadd.f32 %v86, %v115
  %117 = vdwg.mxu0
  %v118 = vld [vmem:[%s4] sm:$0xf]
  %v119 = vld [vmem:[%s4 + $0x4] sm:$0xf]
  %v120 = vld [vmem:[%s4 + $0x8] sm:$0xf]
  %v121 = vld [vmem:[%s4 + $0xc] sm:$0xf]
  %v122 = vld [vmem:[%s5] sm:$0x1]
  %v124 = vperm.slane %v122, 0
  %v130 = vunpack.c.l.b16 %v118
  %v131 = vunpack.c.l.b16 %v119
  %v132 = vunpack.c.l.b16 %v120
  %v133 = vunpack.c.l.b16 %v121
  %v134 = vpack.c.b16 %v131, %v130
  %v135 = vpack.c.b16 %v133, %v132
  %138 = vmatpush.bf16.msra.mxu0 0
  %139 = vmatpush.bf16.msra.mxu0 0
  %140 = vmatpush.bf16.msra.mxu0 0
  %141 = vmatpush.bf16.msra.mxu0 0
  %142 = vmatpush.bf16.msra.mxu0 0
  %143 = vmatpush.bf16.msra.mxu0 0
  %144 = vmatpush.bf16.msra.mxu0 %v135
  %145 = vmatpush.bf16.msra.mxu0 %v134
  %146 = vmatmul.bf16.gmra.mxu0 %v102
  %v147 = vpop.f32.mrf.mxu0
  %v148 = vadd.f32 %v124, %v147
  %v149 = vpop.f32.mrf.mxu0
  %v150 = vadd.f32 %v124, %v149
  %151 = vdwg.mxu0
  %v152 = vld [vmem:[%s6] sm:$0xf]
  %v153 = vld [vmem:[%s6 + $0x4] sm:$0xf]
  %v154 = vld [vmem:[%s6 + $0x8] sm:$0xf]
  %v155 = vld [vmem:[%s6 + $0xc] sm:$0xf]
  %v156 = vld [vmem:[%s7] sm:$0x1]
  %v158 = vperm.slane %v156, 0
  %v164 = vunpack.c.l.b16 %v152
  %v165 = vunpack.c.l.b16 %v153
  %v166 = vunpack.c.l.b16 %v154
  %v167 = vunpack.c.l.b16 %v155
  %v168 = vpack.c.b16 %v165, %v164
  %v169 = vpack.c.b16 %v167, %v166
  %172 = vmatpush.bf16.msra.mxu0 0
  %173 = vmatpush.bf16.msra.mxu0 0
  %174 = vmatpush.bf16.msra.mxu0 0
  %175 = vmatpush.bf16.msra.mxu0 0
  %176 = vmatpush.bf16.msra.mxu0 0
  %177 = vmatpush.bf16.msra.mxu0 0
  %178 = vmatpush.bf16.msra.mxu0 %v169
  %179 = vmatpush.bf16.msra.mxu0 %v168
  %180 = vmatmul.bf16.gmra.mxu0 %v102
  %v181 = vpop.f32.mrf.mxu0
  %v182 = vadd.f32 %v158, %v181
  %v183 = vpop.f32.mrf.mxu0
  %v184 = vadd.f32 %v158, %v183
  %185 = vdwg.mxu0
  %188 = vrot.lane.b32.xlu0 %v114, 120
  %v189 = vpop.permute.xlu0 %188
  %190 = vrot.lane.b32.xlu0 %v116, 120
  %v191 = vpop.permute.xlu0 %190
  %194 = vrot.lane.b32.xlu0 %v114, 112
  %v195 = vpop.permute.xlu0 %194
  %196 = vrot.lane.b32.xlu0 %v116, 112
  %v197 = vpop.permute.xlu0 %196
  %200 = vrot.lane.b32.xlu0 %v114, 104
  %v201 = vpop.permute.xlu0 %200
  %202 = vrot.lane.b32.xlu0 %v116, 104
  %v203 = vpop.permute.xlu0 %202
  %v206 = vpack.c.bf16 %v114, %v114
  %v207 = vpack.c.bf16 %v116, %v116
  %v208 = vpack.c.bf16 %v189, %v189
  %v209 = vpack.c.bf16 %v191, %v191
  %v210 = vpack.c.bf16 %v195, %v195
  %v211 = vpack.c.bf16 %v197, %v197
  %v212 = vpack.c.bf16 %v201, %v201
  %v213 = vpack.c.bf16 %v203, %v203
  %216 = vrot.lane.b32.xlu0 %v148, 120
  %v217 = vpop.permute.xlu0 %216
  %218 = vrot.lane.b32.xlu0 %v150, 120
  %v219 = vpop.permute.xlu0 %218
  %222 = vrot.lane.b32.xlu0 %v148, 112
  %v223 = vpop.permute.xlu0 %222
  %224 = vrot.lane.b32.xlu0 %v150, 112
  %v225 = vpop.permute.xlu0 %224
  %228 = vrot.lane.b32.xlu0 %v148, 104
  %v229 = vpop.permute.xlu0 %228
  %230 = vrot.lane.b32.xlu0 %v150, 104
  %v231 = vpop.permute.xlu0 %230
  %v234 = vpack.c.bf16 %v148, %v148
  %v235 = vpack.c.bf16 %v150, %v150
  %v236 = vpack.c.bf16 %v217, %v217
  %v237 = vpack.c.bf16 %v219, %v219
  %v238 = vpack.c.bf16 %v223, %v223
  %v239 = vpack.c.bf16 %v225, %v225
  %v240 = vpack.c.bf16 %v229, %v229
  %v241 = vpack.c.bf16 %v231, %v231
  %244 = vrot.lane.b32.xlu0 %v182, 120
  %v245 = vpop.permute.xlu0 %244
  %246 = vrot.lane.b32.xlu0 %v184, 120
  %v247 = vpop.permute.xlu0 %246
  %250 = vrot.lane.b32.xlu0 %v182, 112
  %v251 = vpop.permute.xlu0 %250
  %252 = vrot.lane.b32.xlu0 %v184, 112
  %v253 = vpop.permute.xlu0 %252
  %256 = vrot.lane.b32.xlu0 %v182, 104
  %v257 = vpop.permute.xlu0 %256
  %258 = vrot.lane.b32.xlu0 %v184, 104
  %v259 = vpop.permute.xlu0 %258
  %v262 = vpack.c.bf16 %v182, %v182
  %v263 = vpack.c.bf16 %v184, %v184
  %v264 = vpack.c.bf16 %v245, %v245
  %v265 = vpack.c.bf16 %v247, %v247
  %v266 = vpack.c.bf16 %v251, %v251
  %v267 = vpack.c.bf16 %v253, %v253
  %v268 = vpack.c.bf16 %v257, %v257
  %v269 = vpack.c.bf16 %v259, %v259
  %vm270 = vcmask 64512
  %v272 = vsel %vm270, %v206, 0
  %v275 = vsel %vm270, %v234, 0
  %277 = vmatpush.bf16.xpose.msra.mxu0 0
  %278 = vmatpush.bf16.xpose.msra.mxu0 0
  %279 = vmatpush.bf16.xpose.msra.mxu0 0
  %280 = vmatpush.bf16.xpose.msra.mxu0 0
  %281 = vmatpush.bf16.xpose.msra.mxu0 0
  %282 = vmatpush.bf16.xpose.msra.mxu0 0
  %283 = vmatpush.bf16.xpose.msra.mxu0 0
  %284 = vmatpush.bf16.xpose.msra.mxu0 %v275
  %285 = vmatmul.bf16.gmra.mxu0 %v272
  %v286 = vpop.f32.mrf.mxu0
  %v287 = vadd.f32 0.0, %v286
  %v288 = vpop.f32.mrf.mxu0
  %289 = vdwg.mxu0
  %v291 = vsel %vm270, %v207, 0
  %v294 = vsel %vm270, %v235, 0
  %296 = vmatpush.bf16.xpose.msra.mxu0 0
  %297 = vmatpush.bf16.xpose.msra.mxu0 0
  %298 = vmatpush.bf16.xpose.msra.mxu0 0
  %299 = vmatpush.bf16.xpose.msra.mxu0 0
  %300 = vmatpush.bf16.xpose.msra.mxu0 0
  %301 = vmatpush.bf16.xpose.msra.mxu0 0
  %302 = vmatpush.bf16.xpose.msra.mxu0 0
  %303 = vmatpush.bf16.xpose.msra.mxu0 %v294
  %304 = vmatmul.bf16.gmra.mxu0 %v291
  %v305 = vpop.f32.mrf.mxu0
  %v306 = vadd.f32 0.0, %v305
  %v307 = vpop.f32.mrf.mxu0
  %308 = vdwg.mxu0
  %v310 = vsel %vm270, %v208, 0
  %v313 = vsel %vm270, %v236, 0
  %315 = vmatpush.bf16.xpose.msra.mxu0 0
  %316 = vmatpush.bf16.xpose.msra.mxu0 0
  %317 = vmatpush.bf16.xpose.msra.mxu0 0
  %318 = vmatpush.bf16.xpose.msra.mxu0 0
  %319 = vmatpush.bf16.xpose.msra.mxu0 0
  %320 = vmatpush.bf16.xpose.msra.mxu0 0
  %321 = vmatpush.bf16.xpose.msra.mxu0 0
  %322 = vmatpush.bf16.xpose.msra.mxu0 %v313
  %323 = vmatmul.bf16.gmra.mxu0 %v310
  %v324 = vpop.f32.mrf.mxu0
  %v325 = vadd.f32 0.0, %v324
  %v326 = vpop.f32.mrf.mxu0
  %327 = vdwg.mxu0
  %v329 = vsel %vm270, %v209, 0
  %v332 = vsel %vm270, %v237, 0
  %334 = vmatpush.bf16.xpose.msra.mxu0 0
  %335 = vmatpush.bf16.xpose.msra.mxu0 0
  %336 = vmatpush.bf16.xpose.msra.mxu0 0
  %337 = vmatpush.bf16.xpose.msra.mxu0 0
  %338 = vmatpush.bf16.xpose.msra.mxu0 0
  %339 = vmatpush.bf16.xpose.msra.mxu0 0
  %340 = vmatpush.bf16.xpose.msra.mxu0 0
  %341 = vmatpush.bf16.xpose.msra.mxu0 %v332
  %342 = vmatmul.bf16.gmra.mxu0 %v329
  %v343 = vpop.f32.mrf.mxu0
  %v344 = vadd.f32 0.0, %v343
  %v345 = vpop.f32.mrf.mxu0
  %346 = vdwg.mxu0
  %v348 = vsel %vm270, %v210, 0
  %v351 = vsel %vm270, %v238, 0
  %353 = vmatpush.bf16.xpose.msra.mxu0 0
  %354 = vmatpush.bf16.xpose.msra.mxu0 0
  %355 = vmatpush.bf16.xpose.msra.mxu0 0
  %356 = vmatpush.bf16.xpose.msra.mxu0 0
  %357 = vmatpush.bf16.xpose.msra.mxu0 0
  %358 = vmatpush.bf16.xpose.msra.mxu0 0
  %359 = vmatpush.bf16.xpose.msra.mxu0 0
  %360 = vmatpush.bf16.xpose.msra.mxu0 %v351
  %361 = vmatmul.bf16.gmra.mxu0 %v348
  %v362 = vpop.f32.mrf.mxu0
  %v363 = vadd.f32 0.0, %v362
  %v364 = vpop.f32.mrf.mxu0
  %365 = vdwg.mxu0
  %v367 = vsel %vm270, %v211, 0
  %v370 = vsel %vm270, %v239, 0
  %372 = vmatpush.bf16.xpose.msra.mxu0 0
  %373 = vmatpush.bf16.xpose.msra.mxu0 0
  %374 = vmatpush.bf16.xpose.msra.mxu0 0
  %375 = vmatpush.bf16.xpose.msra.mxu0 0
  %376 = vmatpush.bf16.xpose.msra.mxu0 0
  %377 = vmatpush.bf16.xpose.msra.mxu0 0
  %378 = vmatpush.bf16.xpose.msra.mxu0 0
  %379 = vmatpush.bf16.xpose.msra.mxu0 %v370
  %380 = vmatmul.bf16.gmra.mxu0 %v367
  %v381 = vpop.f32.mrf.mxu0
  %v382 = vadd.f32 0.0, %v381
  %v383 = vpop.f32.mrf.mxu0
  %384 = vdwg.mxu0
  %v386 = vsel %vm270, %v212, 0
  %v389 = vsel %vm270, %v240, 0
  %391 = vmatpush.bf16.xpose.msra.mxu0 0
  %392 = vmatpush.bf16.xpose.msra.mxu0 0
  %393 = vmatpush.bf16.xpose.msra.mxu0 0
  %394 = vmatpush.bf16.xpose.msra.mxu0 0
  %395 = vmatpush.bf16.xpose.msra.mxu0 0
  %396 = vmatpush.bf16.xpose.msra.mxu0 0
  %397 = vmatpush.bf16.xpose.msra.mxu0 0
  %398 = vmatpush.bf16.xpose.msra.mxu0 %v389
  %399 = vmatmul.bf16.gmra.mxu0 %v386
  %v400 = vpop.f32.mrf.mxu0
  %v401 = vadd.f32 0.0, %v400
  %v402 = vpop.f32.mrf.mxu0
  %403 = vdwg.mxu0
  %v405 = vsel %vm270, %v213, 0
  %v408 = vsel %vm270, %v241, 0
  %410 = vmatpush.bf16.xpose.msra.mxu0 0
  %411 = vmatpush.bf16.xpose.msra.mxu0 0
  %412 = vmatpush.bf16.xpose.msra.mxu0 0
  %413 = vmatpush.bf16.xpose.msra.mxu0 0
  %414 = vmatpush.bf16.xpose.msra.mxu0 0
  %415 = vmatpush.bf16.xpose.msra.mxu0 0
  %416 = vmatpush.bf16.xpose.msra.mxu0 0
  %417 = vmatpush.bf16.xpose.msra.mxu0 %v408
  %418 = vmatmul.bf16.gmra.mxu0 %v405
  %v419 = vpop.f32.mrf.mxu0
  %v420 = vadd.f32 0.0, %v419
  %v421 = vpop.f32.mrf.mxu0
  %422 = vdwg.mxu0
  %v423 = vmul.f32 %v287, 0.35355338
  %v424 = vmul.f32 %v306, 0.35355338
  %v425 = vmul.f32 %v325, 0.35355338
  %v426 = vmul.f32 %v344, 0.35355338
  %v427 = vmul.f32 %v363, 0.35355338
  %v428 = vmul.f32 %v382, 0.35355338
  %v429 = vmul.f32 %v401, 0.35355338
  %v430 = vmul.f32 %v420, 0.35355338
  %v431 = vperm.slane %v76, 0
  %v432 = vperm.slane %v78, 0
  %v435 = vadd.f32 %v423, %v431
  %v436 = vadd.f32 %v424, %v432
  %v437 = vadd.f32 %v425, %v431
  %v438 = vadd.f32 %v426, %v432
  %v439 = vadd.f32 %v427, %v431
  %v440 = vadd.f32 %v428, %v432
  %v441 = vadd.f32 %v429, %v431
  %v442 = vadd.f32 %v430, %v432
  %v443 = vsel %vm270, %v435, -inf
  %444 = vmax.xlane.f32.xlu0 %v443
  %v445 = vpop.xlane.xlu0 %444
  %v446 = vsel %vm270, %v436, -inf
  %447 = vmax.xlane.f32.xlu0 %v446
  %v448 = vpop.xlane.xlu0 %447
  %v449 = vsel %vm270, %v437, -inf
  %450 = vmax.xlane.f32.xlu0 %v449
  %v451 = vpop.xlane.xlu0 %450
  %v452 = vsel %vm270, %v438, -inf
  %453 = vmax.xlane.f32.xlu0 %v452
  %v454 = vpop.xlane.xlu0 %453
  %v455 = vsel %vm270, %v439, -inf
  %456 = vmax.xlane.f32.xlu0 %v455
  %v457 = vpop.xlane.xlu0 %456
  %v458 = vsel %vm270, %v440, -inf
  %459 = vmax.xlane.f32.xlu0 %v458
  %v460 = vpop.xlane.xlu0 %459
  %v461 = vsel %vm270, %v441, -inf
  %462 = vmax.xlane.f32.xlu0 %v461
  %v463 = vpop.xlane.xlu0 %462
  %v464 = vsel %vm270, %v442, -inf
  %465 = vmax.xlane.f32.xlu0 %v464
  %v466 = vpop.xlane.xlu0 %465
  %v467 = vsub.f32 %v435, %v445
  %v468 = vsub.f32 %v436, %v448
  %v469 = vsub.f32 %v437, %v451
  %v470 = vsub.f32 %v438, %v454
  %v471 = vsub.f32 %v439, %v457
  %v472 = vsub.f32 %v440, %v460
  %v473 = vsub.f32 %v441, %v463
  %v474 = vsub.f32 %v442, %v466
  %v475 = vmul.f32 %v467, 1.442695
  %v476 = vpow.pop %v475
  %v477 = vmul.f32 %v468, 1.442695
  %v478 = vpow.pop %v477
  %v479 = vmul.f32 %v469, 1.442695
  %v480 = vpow.pop %v479
  %v481 = vmul.f32 %v470, 1.442695
  %v482 = vpow.pop %v481
  %v483 = vmul.f32 %v471, 1.442695
  %v484 = vpow.pop %v483
  %v485 = vmul.f32 %v472, 1.442695
  %v486 = vpow.pop %v485
  %v487 = vmul.f32 %v473, 1.442695
  %v488 = vpow.pop %v487
  %v489 = vmul.f32 %v474, 1.442695
  %v490 = vpow.pop %v489
  %v491 = vsel %vm270, %v476, 0.0
  %492 = vadd.xlane.f32.xlu0 %v491
  %v493 = vpop.xlane.xlu0 %492
  %v494 = vsel %vm270, %v478, 0.0
  %495 = vadd.xlane.f32.xlu0 %v494
  %v496 = vpop.xlane.xlu0 %495
  %v497 = vsel %vm270, %v480, 0.0
  %498 = vadd.xlane.f32.xlu0 %v497
  %v499 = vpop.xlane.xlu0 %498
  %v500 = vsel %vm270, %v482, 0.0
  %501 = vadd.xlane.f32.xlu0 %v500
  %v502 = vpop.xlane.xlu0 %501
  %v503 = vsel %vm270, %v484, 0.0
  %504 = vadd.xlane.f32.xlu0 %v503
  %v505 = vpop.xlane.xlu0 %504
  %v506 = vsel %vm270, %v486, 0.0
  %507 = vadd.xlane.f32.xlu0 %v506
  %v508 = vpop.xlane.xlu0 %507
  %v509 = vsel %vm270, %v488, 0.0
  %510 = vadd.xlane.f32.xlu0 %v509
  %v511 = vpop.xlane.xlu0 %510
  %v512 = vsel %vm270, %v490, 0.0
  %513 = vadd.xlane.f32.xlu0 %v512
  %v514 = vpop.xlane.xlu0 %513
  %v515 = vrcp.pop %v493
  %v516 = vrcp.pop %v496
  %v517 = vrcp.pop %v499
  %v518 = vrcp.pop %v502
  %v519 = vrcp.pop %v505
  %v520 = vrcp.pop %v508
  %v521 = vrcp.pop %v511
  %v522 = vrcp.pop %v514
  %v523 = vmul.f32 %v476, %v515
  %v524 = vmul.f32 %v478, %v516
  %v525 = vmul.f32 %v480, %v517
  %v526 = vmul.f32 %v482, %v518
  %v527 = vmul.f32 %v484, %v519
  %v528 = vmul.f32 %v486, %v520
  %v529 = vmul.f32 %v488, %v521
  %v530 = vmul.f32 %v490, %v522
  %v531 = vpack.c.bf16 %v523, %v523
  %v532 = vpack.c.bf16 %v524, %v524
  %v533 = vpack.c.bf16 %v525, %v525
  %v534 = vpack.c.bf16 %v526, %v526
  %v535 = vpack.c.bf16 %v527, %v527
  %v536 = vpack.c.bf16 %v528, %v528
  %v537 = vpack.c.bf16 %v529, %v529
  %v538 = vpack.c.bf16 %v530, %v530
  %v540 = vsel %vm270, %v531, 0
  %vm542 = vcmask 1043456
  %v544 = vsel %vm542, %v262, 0
  %546 = vmatpush.bf16.msra.mxu0 0
  %547 = vmatpush.bf16.msra.mxu0 0
  %548 = vmatpush.bf16.msra.mxu0 0
  %549 = vmatpush.bf16.msra.mxu0 0
  %550 = vmatpush.bf16.msra.mxu0 0
  %551 = vmatpush.bf16.msra.mxu0 0
  %552 = vmatpush.bf16.msra.mxu0 0
  %553 = vmatpush.bf16.msra.mxu0 %v544
  %554 = vmatmul.bf16.gmra.mxu0 %v540
  %v555 = vpop.f32.mrf.mxu0
  %v556 = vadd.f32 0.0, %v555
  %v557 = vpop.f32.mrf.mxu0
  %558 = vdwg.mxu0
  %v560 = vsel %vm270, %v532, 0
  %v563 = vsel %vm542, %v263, 0
  %565 = vmatpush.bf16.msra.mxu0 0
  %566 = vmatpush.bf16.msra.mxu0 0
  %567 = vmatpush.bf16.msra.mxu0 0
  %568 = vmatpush.bf16.msra.mxu0 0
  %569 = vmatpush.bf16.msra.mxu0 0
  %570 = vmatpush.bf16.msra.mxu0 0
  %571 = vmatpush.bf16.msra.mxu0 0
  %572 = vmatpush.bf16.msra.mxu0 %v563
  %573 = vmatmul.bf16.gmra.mxu0 %v560
  %v574 = vpop.f32.mrf.mxu0
  %v575 = vadd.f32 0.0, %v574
  %v576 = vpop.f32.mrf.mxu0
  %577 = vdwg.mxu0
  %v579 = vsel %vm270, %v533, 0
  %v582 = vsel %vm542, %v264, 0
  %584 = vmatpush.bf16.msra.mxu0 0
  %585 = vmatpush.bf16.msra.mxu0 0
  %586 = vmatpush.bf16.msra.mxu0 0
  %587 = vmatpush.bf16.msra.mxu0 0
  %588 = vmatpush.bf16.msra.mxu0 0
  %589 = vmatpush.bf16.msra.mxu0 0
  %590 = vmatpush.bf16.msra.mxu0 0
  %591 = vmatpush.bf16.msra.mxu0 %v582
  %592 = vmatmul.bf16.gmra.mxu0 %v579
  %v593 = vpop.f32.mrf.mxu0
  %v594 = vadd.f32 0.0, %v593
  %v595 = vpop.f32.mrf.mxu0
  %596 = vdwg.mxu0
  %v598 = vsel %vm270, %v534, 0
  %v601 = vsel %vm542, %v265, 0
  %603 = vmatpush.bf16.msra.mxu0 0
  %604 = vmatpush.bf16.msra.mxu0 0
  %605 = vmatpush.bf16.msra.mxu0 0
  %606 = vmatpush.bf16.msra.mxu0 0
  %607 = vmatpush.bf16.msra.mxu0 0
  %608 = vmatpush.bf16.msra.mxu0 0
  %609 = vmatpush.bf16.msra.mxu0 0
  %610 = vmatpush.bf16.msra.mxu0 %v601
  %611 = vmatmul.bf16.gmra.mxu0 %v598
  %v612 = vpop.f32.mrf.mxu0
  %v613 = vadd.f32 0.0, %v612
  %v614 = vpop.f32.mrf.mxu0
  %615 = vdwg.mxu0
  %v617 = vsel %vm270, %v535, 0
  %v620 = vsel %vm542, %v266, 0
  %622 = vmatpush.bf16.msra.mxu0 0
  %623 = vmatpush.bf16.msra.mxu0 0
  %624 = vmatpush.bf16.msra.mxu0 0
  %625 = vmatpush.bf16.msra.mxu0 0
  %626 = vmatpush.bf16.msra.mxu0 0
  %627 = vmatpush.bf16.msra.mxu0 0
  %628 = vmatpush.bf16.msra.mxu0 0
  %629 = vmatpush.bf16.msra.mxu0 %v620
  %630 = vmatmul.bf16.gmra.mxu0 %v617
  %v631 = vpop.f32.mrf.mxu0
  %v632 = vadd.f32 0.0, %v631
  %v633 = vpop.f32.mrf.mxu0
  %634 = vdwg.mxu0
  %v636 = vsel %vm270, %v536, 0
  %v639 = vsel %vm542, %v267, 0
  %641 = vmatpush.bf16.msra.mxu0 0
  %642 = vmatpush.bf16.msra.mxu0 0
  %643 = vmatpush.bf16.msra.mxu0 0
  %644 = vmatpush.bf16.msra.mxu0 0
  %645 = vmatpush.bf16.msra.mxu0 0
  %646 = vmatpush.bf16.msra.mxu0 0
  %647 = vmatpush.bf16.msra.mxu0 0
  %648 = vmatpush.bf16.msra.mxu0 %v639
  %649 = vmatmul.bf16.gmra.mxu0 %v636
  %v650 = vpop.f32.mrf.mxu0
  %v651 = vadd.f32 0.0, %v650
  %v652 = vpop.f32.mrf.mxu0
  %653 = vdwg.mxu0
  %v655 = vsel %vm270, %v537, 0
  %v658 = vsel %vm542, %v268, 0
  %660 = vmatpush.bf16.msra.mxu0 0
  %661 = vmatpush.bf16.msra.mxu0 0
  %662 = vmatpush.bf16.msra.mxu0 0
  %663 = vmatpush.bf16.msra.mxu0 0
  %664 = vmatpush.bf16.msra.mxu0 0
  %665 = vmatpush.bf16.msra.mxu0 0
  %666 = vmatpush.bf16.msra.mxu0 0
  %667 = vmatpush.bf16.msra.mxu0 %v658
  %668 = vmatmul.bf16.gmra.mxu0 %v655
  %v669 = vpop.f32.mrf.mxu0
  %v670 = vadd.f32 0.0, %v669
  %v671 = vpop.f32.mrf.mxu0
  %672 = vdwg.mxu0
  %v674 = vsel %vm270, %v538, 0
  %v677 = vsel %vm542, %v269, 0
  %679 = vmatpush.bf16.msra.mxu0 0
  %680 = vmatpush.bf16.msra.mxu0 0
  %681 = vmatpush.bf16.msra.mxu0 0
  %682 = vmatpush.bf16.msra.mxu0 0
  %683 = vmatpush.bf16.msra.mxu0 0
  %684 = vmatpush.bf16.msra.mxu0 0
  %685 = vmatpush.bf16.msra.mxu0 0
  %686 = vmatpush.bf16.msra.mxu0 %v677
  %687 = vmatmul.bf16.gmra.mxu0 %v674
  %v688 = vpop.f32.mrf.mxu0
  %v689 = vadd.f32 0.0, %v688
  %v690 = vpop.f32.mrf.mxu0
  %691 = vdwg.mxu0
  %694 = vrot.lane.b32.xlu0 %v594, 8
  %v695 = vpop.permute.xlu0 %694
  %696 = vrot.lane.b32.xlu0 %v613, 8
  %v697 = vpop.permute.xlu0 %696
  %702 = vrot.lane.b32.xlu0 %v632, 16
  %v703 = vpop.permute.xlu0 %702
  %704 = vrot.lane.b32.xlu0 %v651, 16
  %v705 = vpop.permute.xlu0 %704
  %710 = vrot.lane.b32.xlu0 %v670, 24
  %v711 = vpop.permute.xlu0 %710
  %712 = vrot.lane.b32.xlu0 %v689, 24
  %v713 = vpop.permute.xlu0 %712
  %v716 = vsel %vm270, %v556, %v695
  %v717 = vsel %vm270, %v575, %v697
  %vm718 = vcmask 130048
  %v719 = vsel %vm718, %v716, %v703
  %v720 = vsel %vm718, %v717, %v705
  %vm721 = vcmask 195584
  %v722 = vsel %vm721, %v719, %v711
  %v723 = vsel %vm721, %v720, %v713
  %v724 = vpack.c.bf16 %v723, %v722
  %v725 = vld [vmem:[%s8] sm:$0xf]
  %v726 = vld [vmem:[%s8 + $0x4] sm:$0xf]
  %v727 = vld [vmem:[%s8 + $0x8] sm:$0xf]
  %v728 = vld [vmem:[%s8 + $0xc] sm:$0xf]
  %v729 = vld [vmem:[%s9] sm:$0x1]
  %v731 = vperm.slane %v729, 0
  %v737 = vunpack.c.l.b16 %v725
  %v738 = vunpack.c.l.b16 %v726
  %v739 = vunpack.c.l.b16 %v727
  %v740 = vunpack.c.l.b16 %v728
  %v741 = vpack.c.b16 %v738, %v737
  %v742 = vpack.c.b16 %v740, %v739
  %v746 = vsel %vm100, %v724, 0
  %748 = vmatpush.bf16.msra.mxu0 0
  %749 = vmatpush.bf16.msra.mxu0 0
  %750 = vmatpush.bf16.msra.mxu0 0
  %751 = vmatpush.bf16.msra.mxu0 0
  %752 = vmatpush.bf16.msra.mxu0 0
  %753 = vmatpush.bf16.msra.mxu0 0
  %754 = vmatpush.bf16.msra.mxu0 %v742
  %755 = vmatpush.bf16.msra.mxu0 %v741
  %756 = vmatmul.bf16.gmra.mxu0 %v746
  %v757 = vpop.f32.mrf.mxu0
  %v758 = vadd.f32 %v731, %v757
  %v759 = vpop.f32.mrf.mxu0
  %v760 = vadd.f32 %v731, %v759
  %761 = vdwg.mxu0
  %v762 = vadd.f32 %v72, %v758
  %v763 = vadd.f32 %v73, %v760
  %v764 = vld [vmem:[%s10] sm:$0x1]
  %v765 = vld [vmem:[%s11] sm:$0x1]
  %v766 = vsel %vm100, %v762, 0.0
  %767 = vadd.xlane.f32.xlu0 %v766
  %v768 = vpop.xlane.xlu0 %767
  %v769 = vsel %vm100, %v763, 0.0
  %770 = vadd.xlane.f32.xlu0 %v769
  %v771 = vpop.xlane.xlu0 %770
  %v772 = vrcp.pop 32.0
  %v773 = vmul.f32 32.0, %v772
  %v774 = vsub.f32 1.0, %v773
  %v775 = vmul.f32 %v772, %v774
  %v776 = vadd.f32 %v772, %v775
  %vm777 = vweird.f32 %v772
  %v778 = vsel %vm777, %v772, %v776
  %v779 = vmul.f32 %v768, %v778
  %v780 = vmul.f32 %v771, %v778
  %v781 = vsub.f32 %v762, %v779
  %v782 = vsub.f32 %v763, %v780
  %v783 = vmul.f32 %v781, %v781
  %v784 = vmul.f32 %v782, %v782
  %v785 = vsel %vm100, %v783, 0.0
  %786 = vadd.xlane.f32.xlu0 %v785
  %v787 = vpop.xlane.xlu0 %786
  %v788 = vsel %vm100, %v784, 0.0
  %789 = vadd.xlane.f32.xlu0 %v788
  %v790 = vpop.xlane.xlu0 %789
  %v791 = vmul.f32 %v787, %v778
  %v792 = vmul.f32 %v790, %v778
  %v793 = vadd.f32 %v791, 1e-05
  %v794 = vadd.f32 %v792, 1e-05
  %v795 = vrsqrt.pop %v793
  %v796 = vmul.f32 %v795, %v793
  %v797 = vmul.f32 %v796, %v795
  %v798 = vmul.f32 0.5, %v797
  %v799 = vsub.f32 1.5, %v798
  %v800 = vmul.f32 %v795, %v799
  %vm801 = vweird.f32 %v793
  %vm802 = vweird.f32 %v795
  %vm803 = vmor %vm801, %vm802
  %v804 = vsel %vm803, %v795, %v800
  %v805 = vrsqrt.pop %v794
  %v806 = vmul.f32 %v805, %v794
  %v807 = vmul.f32 %v806, %v805
  %v808 = vmul.f32 0.5, %v807
  %v809 = vsub.f32 1.5, %v808
  %v810 = vmul.f32 %v805, %v809
  %vm811 = vweird.f32 %v794
  %vm812 = vweird.f32 %v805
  %vm813 = vmor %vm811, %vm812
  %v814 = vsel %vm813, %v805, %v810
  %v815 = vmul.f32 %v781, %v804
  %v816 = vmul.f32 %v782, %v814
  %v818 = vperm.slane %v764, 0
  %v820 = vmul.f32 %v815, %v818
  %v821 = vmul.f32 %v816, %v818
  %v823 = vperm.slane %v765, 0
  %v825 = vadd.f32 %v820, %v823
  %v826 = vadd.f32 %v821, %v823
  %v827 = vpack.c.bf16 %v826, %v825
  %v828 = vld [vmem:[%s12] sm:$0xf]
  %v829 = vld [vmem:[%s12 + $0x4] sm:$0xf]
  %v830 = vld [vmem:[%s12 + $0x8] sm:$0xf]
  %v831 = vld [vmem:[%s12 + $0xc] sm:$0xf]
  %v832 = vld [vmem:[%s13] sm:$0x1]
  %v834 = vperm.slane %v832, 0
  %v840 = vunpack.c.l.b16 %v828
  %v841 = vunpack.c.l.b16 %v829
  %v842 = vunpack.c.l.b16 %v830
  %v843 = vunpack.c.l.b16 %v831
  %v844 = vpack.c.b16 %v841, %v840
  %v845 = vpack.c.b16 %v843, %v842
  %v849 = vsel %vm100, %v827, 0
  %851 = vmatpush.bf16.msra.mxu0 0
  %852 = vmatpush.bf16.msra.mxu0 0
  %853 = vmatpush.bf16.msra.mxu0 0
  %854 = vmatpush.bf16.msra.mxu0 0
  %855 = vmatpush.bf16.msra.mxu0 0
  %856 = vmatpush.bf16.msra.mxu0 0
  %857 = vmatpush.bf16.msra.mxu0 %v845
  %858 = vmatpush.bf16.msra.mxu0 %v844
  %859 = vmatmul.bf16.gmra.mxu0 %v849
  %v860 = vpop.f32.mrf.mxu0
  %v861 = vadd.f32 %v834, %v860
  %v862 = vpop.f32.mrf.mxu0
  %v863 = vadd.f32 %v834, %v862
  %864 = vdwg.mxu0
  %v865 = vmax.f32 %v861, 0.0
  %v866 = vmax.f32 %v863, 0.0
  %v867 = vpack.c.bf16 %v866, %v865
  %v868 = vld [vmem:[%s14] sm:$0xf]
  %v869 = vld [vmem:[%s14 + $0x4] sm:$0xf]
  %v870 = vld [vmem:[%s14 + $0x8] sm:$0xf]
  %v871 = vld [vmem:[%s14 + $0xc] sm:$0xf]
  %v872 = vld [vmem:[%s14 + $0x10] sm:$0xf]
  %v873 = vld [vmem:[%s14 + $0x14] sm:$0xf]
  %v874 = vld [vmem:[%s14 + $0x18] sm:$0xf]
  %v875 = vld [vmem:[%s14 + $0x1c] sm:$0xf]
  %v876 = vld [vmem:[%s15] sm:$0x1]
  %v878 = vperm.slane %v876, 0
  %v888 = vunpack.c.l.b16 %v868
  %v889 = vunpack.c.l.b16 %v869
  %v890 = vunpack.c.l.b16 %v870
  %v891 = vunpack.c.l.b16 %v871
  %v892 = vunpack.c.l.b16 %v872
  %v893 = vunpack.c.l.b16 %v873
  %v894 = vunpack.c.l.b16 %v874
  %v895 = vunpack.c.l.b16 %v875
  %v896 = vpack.c.b16 %v889, %v888
  %v897 = vpack.c.b16 %v891, %v890
  %v898 = vpack.c.b16 %v893, %v892
  %v899 = vpack.c.b16 %v895, %v894
  %vm904 = vcmask 523264
  %v906 = vsel %vm904, %v867, 0
  %908 = vmatpush.bf16.msra.mxu0 0
  %909 = vmatpush.bf16.msra.mxu0 0
  %910 = vmatpush.bf16.msra.mxu0 0
  %911 = vmatpush.bf16.msra.mxu0 0
  %912 = vmatpush.bf16.msra.mxu0 %v899
  %913 = vmatpush.bf16.msra.mxu0 %v898
  %914 = vmatpush.bf16.msra.mxu0 %v897
  %915 = vmatpush.bf16.msra.mxu0 %v896
  %916 = vmatmul.bf16.gmra.mxu0 %v906
  %v917 = vpop.f32.mrf.mxu0
  %v918 = vadd.f32 %v878, %v917
  %v919 = vpop.f32.mrf.mxu0
  %v920 = vadd.f32 %v878, %v919
  %921 = vdwg.mxu0
  %v922 = vadd.f32 %v825, %v918
  %v923 = vadd.f32 %v826, %v920
  %v924 = vld [vmem:[%s16] sm:$0x1]
  %v925 = vld [vmem:[%s17] sm:$0x1]
  %v926 = vsel %vm100, %v922, 0.0
  %927 = vadd.xlane.f32.xlu0 %v926
  %v928 = vpop.xlane.xlu0 %927
  %v929 = vsel %vm100, %v923, 0.0
  %930 = vadd.xlane.f32.xlu0 %v929
  %v931 = vpop.xlane.xlu0 %930
  %v932 = vmul.f32 %v928, %v778
  %v933 = vmul.f32 %v931, %v778
  %v934 = vsub.f32 %v922, %v932
  %v935 = vsub.f32 %v923, %v933
  %v936 = vmul.f32 %v934, %v934
  %v937 = vmul.f32 %v935, %v935
  %v938 = vsel %vm100, %v936, 0.0
  %939 = vadd.xlane.f32.xlu0 %v938
  %v940 = vpop.xlane.xlu0 %939
  %v941 = vsel %vm100, %v937, 0.0
  %942 = vadd.xlane.f32.xlu0 %v941
  %v943 = vpop.xlane.xlu0 %942
  %v944 = vmul.f32 %v940, %v778
  %v945 = vmul.f32 %v943, %v778
  %v946 = vadd.f32 %v944, 1e-05
  %v947 = vadd.f32 %v945, 1e-05
  %v948 = vrsqrt.pop %v946
  %v949 = vmul.f32 %v948, %v946
  %v950 = vmul.f32 %v949, %v948
  %v951 = vmul.f32 0.5, %v950
  %v952 = vsub.f32 1.5, %v951
  %v953 = vmul.f32 %v948, %v952
  %vm954 = vweird.f32 %v946
  %vm955 = vweird.f32 %v948
  %vm956 = vmor %vm954, %vm955
  %v957 = vsel %vm956, %v948, %v953
  %v958 = vrsqrt.pop %v947
  %v959 = vmul.f32 %v958, %v947
  %v960 = vmul.f32 %v959, %v958
  %v961 = vmul.f32 0.5, %v960
  %v962 = vsub.f32 1.5, %v961
  %v963 = vmul.f32 %v958, %v962
  %vm964 = vweird.f32 %v947
  %vm965 = vweird.f32 %v958
  %vm966 = vmor %vm964, %vm965
  %v967 = vsel %vm966, %v958, %v963
  %v968 = vmul.f32 %v934, %v957
  %v969 = vmul.f32 %v935, %v967
  %v971 = vperm.slane %v924, 0
  %v973 = vmul.f32 %v968, %v971
  %v974 = vmul.f32 %v969, %v971
  %v976 = vperm.slane %v925, 0
  %v978 = vadd.f32 %v973, %v976
  %v979 = vadd.f32 %v974, %v976
  %v980 = vpack.c.bf16 %v979, %v978
  %s981 = scalar_lea.vmem %s2, 16
  %v982 = vld [vmem:[%s981] sm:$0xf]
  %v983 = vld [vmem:[%s981 + $0x4] sm:$0xf]
  %v984 = vld [vmem:[%s981 + $0x8] sm:$0xf]
  %v985 = vld [vmem:[%s981 + $0xc] sm:$0xf]
  %s986 = scalar_lea.vmem %s3, 1
  %v987 = vld [vmem:[%s986] sm:$0x1]
  %v989 = vperm.slane %v987, 0
  %v995 = vunpack.c.l.b16 %v982
  %v996 = vunpack.c.l.b16 %v983
  %v997 = vunpack.c.l.b16 %v984
  %v998 = vunpack.c.l.b16 %v985
  %v999 = vpack.c.b16 %v996, %v995
  %v1000 = vpack.c.b16 %v998, %v997
  %v1004 = vsel %vm100, %v980, 0
  %1006 = vmatpush.bf16.msra.mxu0 0
  %1007 = vmatpush.bf16.msra.mxu0 0
  %1008 = vmatpush.bf16.msra.mxu0 0
  %1009 = vmatpush.bf16.msra.mxu0 0
  %1010 = vmatpush.bf16.msra.mxu0 0
  %1011 = vmatpush.bf16.msra.mxu0 0
  %1012 = vmatpush.bf16.msra.mxu0 %v1000
  %1013 = vmatpush.bf16.msra.mxu0 %v999
  %1014 = vmatmul.bf16.gmra.mxu0 %v1004
  %v1015 = vpop.f32.mrf.mxu0
  %v1016 = vadd.f32 %v989, %v1015
  %v1017 = vpop.f32.mrf.mxu0
  %v1018 = vadd.f32 %v989, %v1017
  %1019 = vdwg.mxu0
  %s1020 = scalar_lea.vmem %s4, 16
  %v1021 = vld [vmem:[%s1020] sm:$0xf]
  %v1022 = vld [vmem:[%s1020 + $0x4] sm:$0xf]
  %v1023 = vld [vmem:[%s1020 + $0x8] sm:$0xf]
  %v1024 = vld [vmem:[%s1020 + $0xc] sm:$0xf]
  %s1025 = scalar_lea.vmem %s5, 1
  %v1026 = vld [vmem:[%s1025] sm:$0x1]
  %v1028 = vperm.slane %v1026, 0
  %v1034 = vunpack.c.l.b16 %v1021
  %v1035 = vunpack.c.l.b16 %v1022
  %v1036 = vunpack.c.l.b16 %v1023
  %v1037 = vunpack.c.l.b16 %v1024
  %v1038 = vpack.c.b16 %v1035, %v1034
  %v1039 = vpack.c.b16 %v1037, %v1036
  %1042 = vmatpush.bf16.msra.mxu0 0
  %1043 = vmatpush.bf16.msra.mxu0 0
  %1044 = vmatpush.bf16.msra.mxu0 0
  %1045 = vmatpush.bf16.msra.mxu0 0
  %1046 = vmatpush.bf16.msra.mxu0 0
  %1047 = vmatpush.bf16.msra.mxu0 0
  %1048 = vmatpush.bf16.msra.mxu0 %v1039
  %1049 = vmatpush.bf16.msra.mxu0 %v1038
  %1050 = vmatmul.bf16.gmra.mxu0 %v1004
  %v1051 = vpop.f32.mrf.mxu0
  %v1052 = vadd.f32 %v1028, %v1051
  %v1053 = vpop.f32.mrf.mxu0
  %v1054 = vadd.f32 %v1028, %v1053
  %1055 = vdwg.mxu0
  %s1056 = scalar_lea.vmem %s6, 16
  %v1057 = vld [vmem:[%s1056] sm:$0xf]
  %v1058 = vld [vmem:[%s1056 + $0x4] sm:$0xf]
  %v1059 = vld [vmem:[%s1056 + $0x8] sm:$0xf]
  %v1060 = vld [vmem:[%s1056 + $0xc] sm:$0xf]
  %s1061 = scalar_lea.vmem %s7, 1
  %v1062 = vld [vmem:[%s1061] sm:$0x1]
  %v1064 = vperm.slane %v1062, 0
  %v1070 = vunpack.c.l.b16 %v1057
  %v1071 = vunpack.c.l.b16 %v1058
  %v1072 = vunpack.c.l.b16 %v1059
  %v1073 = vunpack.c.l.b16 %v1060
  %v1074 = vpack.c.b16 %v1071, %v1070
  %v1075 = vpack.c.b16 %v1073, %v1072
  %1078 = vmatpush.bf16.msra.mxu0 0
  %1079 = vmatpush.bf16.msra.mxu0 0
  %1080 = vmatpush.bf16.msra.mxu0 0
  %1081 = vmatpush.bf16.msra.mxu0 0
  %1082 = vmatpush.bf16.msra.mxu0 0
  %1083 = vmatpush.bf16.msra.mxu0 0
  %1084 = vmatpush.bf16.msra.mxu0 %v1075
  %1085 = vmatpush.bf16.msra.mxu0 %v1074
  %1086 = vmatmul.bf16.gmra.mxu0 %v1004
  %v1087 = vpop.f32.mrf.mxu0
  %v1088 = vadd.f32 %v1064, %v1087
  %v1089 = vpop.f32.mrf.mxu0
  %v1090 = vadd.f32 %v1064, %v1089
  %1091 = vdwg.mxu0
  %1094 = vrot.lane.b32.xlu0 %v1016, 120
  %v1095 = vpop.permute.xlu0 %1094
  %1096 = vrot.lane.b32.xlu0 %v1018, 120
  %v1097 = vpop.permute.xlu0 %1096
  %1100 = vrot.lane.b32.xlu0 %v1016, 112
  %v1101 = vpop.permute.xlu0 %1100
  %1102 = vrot.lane.b32.xlu0 %v1018, 112
  %v1103 = vpop.permute.xlu0 %1102
  %1106 = vrot.lane.b32.xlu0 %v1016, 104
  %v1107 = vpop.permute.xlu0 %1106
  %1108 = vrot.lane.b32.xlu0 %v1018, 104
  %v1109 = vpop.permute.xlu0 %1108
  %v1112 = vpack.c.bf16 %v1016, %v1016
  %v1113 = vpack.c.bf16 %v1018, %v1018
  %v1114 = vpack.c.bf16 %v1095, %v1095
  %v1115 = vpack.c.bf16 %v1097, %v1097
  %v1116 = vpack.c.bf16 %v1101, %v1101
  %v1117 = vpack.c.bf16 %v1103, %v1103
  %v1118 = vpack.c.bf16 %v1107, %v1107
  %v1119 = vpack.c.bf16 %v1109, %v1109
  %1122 = vrot.lane.b32.xlu0 %v1052, 120
  %v1123 = vpop.permute.xlu0 %1122
  %1124 = vrot.lane.b32.xlu0 %v1054, 120
  %v1125 = vpop.permute.xlu0 %1124
  %1128 = vrot.lane.b32.xlu0 %v1052, 112
  %v1129 = vpop.permute.xlu0 %1128
  %1130 = vrot.lane.b32.xlu0 %v1054, 112
  %v1131 = vpop.permute.xlu0 %1130
  %1134 = vrot.lane.b32.xlu0 %v1052, 104
  %v1135 = vpop.permute.xlu0 %1134
  %1136 = vrot.lane.b32.xlu0 %v1054, 104
  %v1137 = vpop.permute.xlu0 %1136
  %v1140 = vpack.c.bf16 %v1052, %v1052
  %v1141 = vpack.c.bf16 %v1054, %v1054
  %v1142 = vpack.c.bf16 %v1123, %v1123
  %v1143 = vpack.c.bf16 %v1125, %v1125
  %v1144 = vpack.c.bf16 %v1129, %v1129
  %v1145 = vpack.c.bf16 %v1131, %v1131
  %v1146 = vpack.c.bf16 %v1135, %v1135
  %v1147 = vpack.c.bf16 %v1137, %v1137
  %1150 = vrot.lane.b32.xlu0 %v1088, 120
  %v1151 = vpop.permute.xlu0 %1150
  %1152 = vrot.lane.b32.xlu0 %v1090, 120
  %v1153 = vpop.permute.xlu0 %1152
  %1156 = vrot.lane.b32.xlu0 %v1088, 112
  %v1157 = vpop.permute.xlu0 %1156
  %1158 = vrot.lane.b32.xlu0 %v1090, 112
  %v1159 = vpop.permute.xlu0 %1158
  %1162 = vrot.lane.b32.xlu0 %v1088, 104
  %v1163 = vpop.permute.xlu0 %1162
  %1164 = vrot.lane.b32.xlu0 %v1090, 104
  %v1165 = vpop.permute.xlu0 %1164
  %v1168 = vpack.c.bf16 %v1088, %v1088
  %v1169 = vpack.c.bf16 %v1090, %v1090
  %v1170 = vpack.c.bf16 %v1151, %v1151
  %v1171 = vpack.c.bf16 %v1153, %v1153
  %v1172 = vpack.c.bf16 %v1157, %v1157
  %v1173 = vpack.c.bf16 %v1159, %v1159
  %v1174 = vpack.c.bf16 %v1163, %v1163
  %v1175 = vpack.c.bf16 %v1165, %v1165
  %v1177 = vsel %vm270, %v1112, 0
  %v1180 = vsel %vm270, %v1140, 0
  %1182 = vmatpush.bf16.xpose.msra.mxu0 0
  %1183 = vmatpush.bf16.xpose.msra.mxu0 0
  %1184 = vmatpush.bf16.xpose.msra.mxu0 0
  %1185 = vmatpush.bf16.xpose.msra.mxu0 0
  %1186 = vmatpush.bf16.xpose.msra.mxu0 0
  %1187 = vmatpush.bf16.xpose.msra.mxu0 0
  %1188 = vmatpush.bf16.xpose.msra.mxu0 0
  %1189 = vmatpush.bf16.xpose.msra.mxu0 %v1180
  %1190 = vmatmul.bf16.gmra.mxu0 %v1177
  %v1191 = vpop.f32.mrf.mxu0
  %v1192 = vadd.f32 0.0, %v1191
  %v1193 = vpop.f32.mrf.mxu0
  %1194 = vdwg.mxu0
  %v1196 = vsel %vm270, %v1113, 0
  %v1199 = vsel %vm270, %v1141, 0
  %1201 = vmatpush.bf16.xpose.msra.mxu0 0
  %1202 = vmatpush.bf16.xpose.msra.mxu0 0
  %1203 = vmatpush.bf16.xpose.msra.mxu0 0
  %1204 = vmatpush.bf16.xpose.msra.mxu0 0
  %1205 = vmatpush.bf16.xpose.msra.mxu0 0
  %1206 = vmatpush.bf16.xpose.msra.mxu0 0
  %1207 = vmatpush.bf16.xpose.msra.mxu0 0
  %1208 = vmatpush.bf16.xpose.msra.mxu0 %v1199
  %1209 = vmatmul.bf16.gmra.mxu0 %v1196
  %v1210 = vpop.f32.mrf.mxu0
  %v1211 = vadd.f32 0.0, %v1210
  %v1212 = vpop.f32.mrf.mxu0
  %1213 = vdwg.mxu0
  %v1215 = vsel %vm270, %v1114, 0
  %v1218 = vsel %vm270, %v1142, 0
  %1220 = vmatpush.bf16.xpose.msra.mxu0 0
  %1221 = vmatpush.bf16.xpose.msra.mxu0 0
  %1222 = vmatpush.bf16.xpose.msra.mxu0 0
  %1223 = vmatpush.bf16.xpose.msra.mxu0 0
  %1224 = vmatpush.bf16.xpose.msra.mxu0 0
  %1225 = vmatpush.bf16.xpose.msra.mxu0 0
  %1226 = vmatpush.bf16.xpose.msra.mxu0 0
  %1227 = vmatpush.bf16.xpose.msra.mxu0 %v1218
  %1228 = vmatmul.bf16.gmra.mxu0 %v1215
  %v1229 = vpop.f32.mrf.mxu0
  %v1230 = vadd.f32 0.0, %v1229
  %v1231 = vpop.f32.mrf.mxu0
  %1232 = vdwg.mxu0
  %v1234 = vsel %vm270, %v1115, 0
  %v1237 = vsel %vm270, %v1143, 0
  %1239 = vmatpush.bf16.xpose.msra.mxu0 0
  %1240 = vmatpush.bf16.xpose.msra.mxu0 0
  %1241 = vmatpush.bf16.xpose.msra.mxu0 0
  %1242 = vmatpush.bf16.xpose.msra.mxu0 0
  %1243 = vmatpush.bf16.xpose.msra.mxu0 0
  %1244 = vmatpush.bf16.xpose.msra.mxu0 0
  %1245 = vmatpush.bf16.xpose.msra.mxu0 0
  %1246 = vmatpush.bf16.xpose.msra.mxu0 %v1237
  %1247 = vmatmul.bf16.gmra.mxu0 %v1234
  %v1248 = vpop.f32.mrf.mxu0
  %v1249 = vadd.f32 0.0, %v1248
  %v1250 = vpop.f32.mrf.mxu0
  %1251 = vdwg.mxu0
  %v1253 = vsel %vm270, %v1116, 0
  %v1256 = vsel %vm270, %v1144, 0
  %1258 = vmatpush.bf16.xpose.msra.mxu0 0
  %1259 = vmatpush.bf16.xpose.msra.mxu0 0
  %1260 = vmatpush.bf16.xpose.msra.mxu0 0
  %1261 = vmatpush.bf16.xpose.msra.mxu0 0
  %1262 = vmatpush.bf16.xpose.msra.mxu0 0
  %1263 = vmatpush.bf16.xpose.msra.mxu0 0
  %1264 = vmatpush.bf16.xpose.msra.mxu0 0
  %1265 = vmatpush.bf16.xpose.msra.mxu0 %v1256
  %1266 = vmatmul.bf16.gmra.mxu0 %v1253
  %v1267 = vpop.f32.mrf.mxu0
  %v1268 = vadd.f32 0.0, %v1267
  %v1269 = vpop.f32.mrf.mxu0
  %1270 = vdwg.mxu0
  %v1272 = vsel %vm270, %v1117, 0
  %v1275 = vsel %vm270, %v1145, 0
  %1277 = vmatpush.bf16.xpose.msra.mxu0 0
  %1278 = vmatpush.bf16.xpose.msra.mxu0 0
  %1279 = vmatpush.bf16.xpose.msra.mxu0 0
  %1280 = vmatpush.bf16.xpose.msra.mxu0 0
  %1281 = vmatpush.bf16.xpose.msra.mxu0 0
  %1282 = vmatpush.bf16.xpose.msra.mxu0 0
  %1283 = vmatpush.bf16.xpose.msra.mxu0 0
  %1284 = vmatpush.bf16.xpose.msra.mxu0 %v1275
  %1285 = vmatmul.bf16.gmra.mxu0 %v1272
  %v1286 = vpop.f32.mrf.mxu0
  %v1287 = vadd.f32 0.0, %v1286
  %v1288 = vpop.f32.mrf.mxu0
  %1289 = vdwg.mxu0
  %v1291 = vsel %vm270, %v1118, 0
  %v1294 = vsel %vm270, %v1146, 0
  %1296 = vmatpush.bf16.xpose.msra.mxu0 0
  %1297 = vmatpush.bf16.xpose.msra.mxu0 0
  %1298 = vmatpush.bf16.xpose.msra.mxu0 0
  %1299 = vmatpush.bf16.xpose.msra.mxu0 0
  %1300 = vmatpush.bf16.xpose.msra.mxu0 0
  %1301 = vmatpush.bf16.xpose.msra.mxu0 0
  %1302 = vmatpush.bf16.xpose.msra.mxu0 0
  %1303 = vmatpush.bf16.xpose.msra.mxu0 %v1294
  %1304 = vmatmul.bf16.gmra.mxu0 %v1291
  %v1305 = vpop.f32.mrf.mxu0
  %v1306 = vadd.f32 0.0, %v1305
  %v1307 = vpop.f32.mrf.mxu0
  %1308 = vdwg.mxu0
  %v1310 = vsel %vm270, %v1119, 0
  %v1313 = vsel %vm270, %v1147, 0
  %1315 = vmatpush.bf16.xpose.msra.mxu0 0
  %1316 = vmatpush.bf16.xpose.msra.mxu0 0
  %1317 = vmatpush.bf16.xpose.msra.mxu0 0
  %1318 = vmatpush.bf16.xpose.msra.mxu0 0
  %1319 = vmatpush.bf16.xpose.msra.mxu0 0
  %1320 = vmatpush.bf16.xpose.msra.mxu0 0
  %1321 = vmatpush.bf16.xpose.msra.mxu0 0
  %1322 = vmatpush.bf16.xpose.msra.mxu0 %v1313
  %1323 = vmatmul.bf16.gmra.mxu0 %v1310
  %v1324 = vpop.f32.mrf.mxu0
  %v1325 = vadd.f32 0.0, %v1324
  %v1326 = vpop.f32.mrf.mxu0
  %1327 = vdwg.mxu0
  %v1328 = vmul.f32 %v1192, 0.35355338
  %v1329 = vmul.f32 %v1211, 0.35355338
  %v1330 = vmul.f32 %v1230, 0.35355338
  %v1331 = vmul.f32 %v1249, 0.35355338
  %v1332 = vmul.f32 %v1268, 0.35355338
  %v1333 = vmul.f32 %v1287, 0.35355338
  %v1334 = vmul.f32 %v1306, 0.35355338
  %v1335 = vmul.f32 %v1325, 0.35355338
  %v1336 = vadd.f32 %v1328, %v431
  %v1337 = vadd.f32 %v1329, %v432
  %v1338 = vadd.f32 %v1330, %v431
  %v1339 = vadd.f32 %v1331, %v432
  %v1340 = vadd.f32 %v1332, %v431
  %v1341 = vadd.f32 %v1333, %v432
  %v1342 = vadd.f32 %v1334, %v431
  %v1343 = vadd.f32 %v1335, %v432
  %v1344 = vsel %vm270, %v1336, -inf
  %1345 = vmax.xlane.f32.xlu0 %v1344
  %v1346 = vpop.xlane.xlu0 %1345
  %v1347 = vsel %vm270, %v1337, -inf
  %1348 = vmax.xlane.f32.xlu0 %v1347
  %v1349 = vpop.xlane.xlu0 %1348
  %v1350 = vsel %vm270, %v1338, -inf
  %1351 = vmax.xlane.f32.xlu0 %v1350
  %v1352 = vpop.xlane.xlu0 %1351
  %v1353 = vsel %vm270, %v1339, -inf
  %1354 = vmax.xlane.f32.xlu0 %v1353
  %v1355 = vpop.xlane.xlu0 %1354
  %v1356 = vsel %vm270, %v1340, -inf
  %1357 = vmax.xlane.f32.xlu0 %v1356
  %v1358 = vpop.xlane.xlu0 %1357
  %v1359 = vsel %vm270, %v1341, -inf
  %1360 = vmax.xlane.f32.xlu0 %v1359
  %v1361 = vpop.xlane.xlu0 %1360
  %v1362 = vsel %vm270, %v1342, -inf
  %1363 = vmax.xlane.f32.xlu0 %v1362
  %v1364 = vpop.xlane.xlu0 %1363
  %v1365 = vsel %vm270, %v1343, -inf
  %1366 = vmax.xlane.f32.xlu0 %v1365
  %v1367 = vpop.xlane.xlu0 %1366
  %v1368 = vsub.f32 %v1336, %v1346
  %v1369 = vsub.f32 %v1337, %v1349
  %v1370 = vsub.f32 %v1338, %v1352
  %v1371 = vsub.f32 %v1339, %v1355
  %v1372 = vsub.f32 %v1340, %v1358
  %v1373 = vsub.f32 %v1341, %v1361
  %v1374 = vsub.f32 %v1342, %v1364
  %v1375 = vsub.f32 %v1343, %v1367
  %v1376 = vmul.f32 %v1368, 1.442695
  %v1377 = vpow.pop %v1376
  %v1378 = vmul.f32 %v1369, 1.442695
  %v1379 = vpow.pop %v1378
  %v1380 = vmul.f32 %v1370, 1.442695
  %v1381 = vpow.pop %v1380
  %v1382 = vmul.f32 %v1371, 1.442695
  %v1383 = vpow.pop %v1382
  %v1384 = vmul.f32 %v1372, 1.442695
  %v1385 = vpow.pop %v1384
  %v1386 = vmul.f32 %v1373, 1.442695
  %v1387 = vpow.pop %v1386
  %v1388 = vmul.f32 %v1374, 1.442695
  %v1389 = vpow.pop %v1388
  %v1390 = vmul.f32 %v1375, 1.442695
  %v1391 = vpow.pop %v1390
  %v1392 = vsel %vm270, %v1377, 0.0
  %1393 = vadd.xlane.f32.xlu0 %v1392
  %v1394 = vpop.xlane.xlu0 %1393
  %v1395 = vsel %vm270, %v1379, 0.0
  %1396 = vadd.xlane.f32.xlu0 %v1395
  %v1397 = vpop.xlane.xlu0 %1396
  %v1398 = vsel %vm270, %v1381, 0.0
  %1399 = vadd.xlane.f32.xlu0 %v1398
  %v1400 = vpop.xlane.xlu0 %1399
  %v1401 = vsel %vm270, %v1383, 0.0
  %1402 = vadd.xlane.f32.xlu0 %v1401
  %v1403 = vpop.xlane.xlu0 %1402
  %v1404 = vsel %vm270, %v1385, 0.0
  %1405 = vadd.xlane.f32.xlu0 %v1404
  %v1406 = vpop.xlane.xlu0 %1405
  %v1407 = vsel %vm270, %v1387, 0.0
  %1408 = vadd.xlane.f32.xlu0 %v1407
  %v1409 = vpop.xlane.xlu0 %1408
  %v1410 = vsel %vm270, %v1389, 0.0
  %1411 = vadd.xlane.f32.xlu0 %v1410
  %v1412 = vpop.xlane.xlu0 %1411
  %v1413 = vsel %vm270, %v1391, 0.0
  %1414 = vadd.xlane.f32.xlu0 %v1413
  %v1415 = vpop.xlane.xlu0 %1414
  %v1416 = vrcp.pop %v1394
  %v1417 = vrcp.pop %v1397
  %v1418 = vrcp.pop %v1400
  %v1419 = vrcp.pop %v1403
  %v1420 = vrcp.pop %v1406
  %v1421 = vrcp.pop %v1409
  %v1422 = vrcp.pop %v1412
  %v1423 = vrcp.pop %v1415
  %v1424 = vmul.f32 %v1377, %v1416
  %v1425 = vmul.f32 %v1379, %v1417
  %v1426 = vmul.f32 %v1381, %v1418
  %v1427 = vmul.f32 %v1383, %v1419
  %v1428 = vmul.f32 %v1385, %v1420
  %v1429 = vmul.f32 %v1387, %v1421
  %v1430 = vmul.f32 %v1389, %v1422
  %v1431 = vmul.f32 %v1391, %v1423
  %v1432 = vpack.c.bf16 %v1424, %v1424
  %v1433 = vpack.c.bf16 %v1425, %v1425
  %v1434 = vpack.c.bf16 %v1426, %v1426
  %v1435 = vpack.c.bf16 %v1427, %v1427
  %v1436 = vpack.c.bf16 %v1428, %v1428
  %v1437 = vpack.c.bf16 %v1429, %v1429
  %v1438 = vpack.c.bf16 %v1430, %v1430
  %v1439 = vpack.c.bf16 %v1431, %v1431
  %v1441 = vsel %vm270, %v1432, 0
  %v1444 = vsel %vm542, %v1168, 0
  %1446 = vmatpush.bf16.msra.mxu0 0
  %1447 = vmatpush.bf16.msra.mxu0 0
  %1448 = vmatpush.bf16.msra.mxu0 0
  %1449 = vmatpush.bf16.msra.mxu0 0
  %1450 = vmatpush.bf16.msra.mxu0 0
  %1451 = vmatpush.bf16.msra.mxu0 0
  %1452 = vmatpush.bf16.msra.mxu0 0
  %1453 = vmatpush.bf16.msra.mxu0 %v1444
  %1454 = vmatmul.bf16.gmra.mxu0 %v1441
  %v1455 = vpop.f32.mrf.mxu0
  %v1456 = vadd.f32 0.0, %v1455
  %v1457 = vpop.f32.mrf.mxu0
  %1458 = vdwg.mxu0
  %v1460 = vsel %vm270, %v1433, 0
  %v1463 = vsel %vm542, %v1169, 0
  %1465 = vmatpush.bf16.msra.mxu0 0
  %1466 = vmatpush.bf16.msra.mxu0 0
  %1467 = vmatpush.bf16.msra.mxu0 0
  %1468 = vmatpush.bf16.msra.mxu0 0
  %1469 = vmatpush.bf16.msra.mxu0 0
  %1470 = vmatpush.bf16.msra.mxu0 0
  %1471 = vmatpush.bf16.msra.mxu0 0
  %1472 = vmatpush.bf16.msra.mxu0 %v1463
  %1473 = vmatmul.bf16.gmra.mxu0 %v1460
  %v1474 = vpop.f32.mrf.mxu0
  %v1475 = vadd.f32 0.0, %v1474
  %v1476 = vpop.f32.mrf.mxu0
  %1477 = vdwg.mxu0
  %v1479 = vsel %vm270, %v1434, 0
  %v1482 = vsel %vm542, %v1170, 0
  %1484 = vmatpush.bf16.msra.mxu0 0
  %1485 = vmatpush.bf16.msra.mxu0 0
  %1486 = vmatpush.bf16.msra.mxu0 0
  %1487 = vmatpush.bf16.msra.mxu0 0
  %1488 = vmatpush.bf16.msra.mxu0 0
  %1489 = vmatpush.bf16.msra.mxu0 0
  %1490 = vmatpush.bf16.msra.mxu0 0
  %1491 = vmatpush.bf16.msra.mxu0 %v1482
  %1492 = vmatmul.bf16.gmra.mxu0 %v1479
  %v1493 = vpop.f32.mrf.mxu0
  %v1494 = vadd.f32 0.0, %v1493
  %v1495 = vpop.f32.mrf.mxu0
  %1496 = vdwg.mxu0
  %v1498 = vsel %vm270, %v1435, 0
  %v1501 = vsel %vm542, %v1171, 0
  %1503 = vmatpush.bf16.msra.mxu0 0
  %1504 = vmatpush.bf16.msra.mxu0 0
  %1505 = vmatpush.bf16.msra.mxu0 0
  %1506 = vmatpush.bf16.msra.mxu0 0
  %1507 = vmatpush.bf16.msra.mxu0 0
  %1508 = vmatpush.bf16.msra.mxu0 0
  %1509 = vmatpush.bf16.msra.mxu0 0
  %1510 = vmatpush.bf16.msra.mxu0 %v1501
  %1511 = vmatmul.bf16.gmra.mxu0 %v1498
  %v1512 = vpop.f32.mrf.mxu0
  %v1513 = vadd.f32 0.0, %v1512
  %v1514 = vpop.f32.mrf.mxu0
  %1515 = vdwg.mxu0
  %v1517 = vsel %vm270, %v1436, 0
  %v1520 = vsel %vm542, %v1172, 0
  %1522 = vmatpush.bf16.msra.mxu0 0
  %1523 = vmatpush.bf16.msra.mxu0 0
  %1524 = vmatpush.bf16.msra.mxu0 0
  %1525 = vmatpush.bf16.msra.mxu0 0
  %1526 = vmatpush.bf16.msra.mxu0 0
  %1527 = vmatpush.bf16.msra.mxu0 0
  %1528 = vmatpush.bf16.msra.mxu0 0
  %1529 = vmatpush.bf16.msra.mxu0 %v1520
  %1530 = vmatmul.bf16.gmra.mxu0 %v1517
  %v1531 = vpop.f32.mrf.mxu0
  %v1532 = vadd.f32 0.0, %v1531
  %v1533 = vpop.f32.mrf.mxu0
  %1534 = vdwg.mxu0
  %v1536 = vsel %vm270, %v1437, 0
  %v1539 = vsel %vm542, %v1173, 0
  %1541 = vmatpush.bf16.msra.mxu0 0
  %1542 = vmatpush.bf16.msra.mxu0 0
  %1543 = vmatpush.bf16.msra.mxu0 0
  %1544 = vmatpush.bf16.msra.mxu0 0
  %1545 = vmatpush.bf16.msra.mxu0 0
  %1546 = vmatpush.bf16.msra.mxu0 0
  %1547 = vmatpush.bf16.msra.mxu0 0
  %1548 = vmatpush.bf16.msra.mxu0 %v1539
  %1549 = vmatmul.bf16.gmra.mxu0 %v1536
  %v1550 = vpop.f32.mrf.mxu0
  %v1551 = vadd.f32 0.0, %v1550
  %v1552 = vpop.f32.mrf.mxu0
  %1553 = vdwg.mxu0
  %v1555 = vsel %vm270, %v1438, 0
  %v1558 = vsel %vm542, %v1174, 0
  %1560 = vmatpush.bf16.msra.mxu0 0
  %1561 = vmatpush.bf16.msra.mxu0 0
  %1562 = vmatpush.bf16.msra.mxu0 0
  %1563 = vmatpush.bf16.msra.mxu0 0
  %1564 = vmatpush.bf16.msra.mxu0 0
  %1565 = vmatpush.bf16.msra.mxu0 0
  %1566 = vmatpush.bf16.msra.mxu0 0
  %1567 = vmatpush.bf16.msra.mxu0 %v1558
  %1568 = vmatmul.bf16.gmra.mxu0 %v1555
  %v1569 = vpop.f32.mrf.mxu0
  %v1570 = vadd.f32 0.0, %v1569
  %v1571 = vpop.f32.mrf.mxu0
  %1572 = vdwg.mxu0
  %v1574 = vsel %vm270, %v1439, 0
  %v1577 = vsel %vm542, %v1175, 0
  %1579 = vmatpush.bf16.msra.mxu0 0
  %1580 = vmatpush.bf16.msra.mxu0 0
  %1581 = vmatpush.bf16.msra.mxu0 0
  %1582 = vmatpush.bf16.msra.mxu0 0
  %1583 = vmatpush.bf16.msra.mxu0 0
  %1584 = vmatpush.bf16.msra.mxu0 0
  %1585 = vmatpush.bf16.msra.mxu0 0
  %1586 = vmatpush.bf16.msra.mxu0 %v1577
  %1587 = vmatmul.bf16.gmra.mxu0 %v1574
  %v1588 = vpop.f32.mrf.mxu0
  %v1589 = vadd.f32 0.0, %v1588
  %v1590 = vpop.f32.mrf.mxu0
  %1591 = vdwg.mxu0
  %1594 = vrot.lane.b32.xlu0 %v1494, 8
  %v1595 = vpop.permute.xlu0 %1594
  %1596 = vrot.lane.b32.xlu0 %v1513, 8
  %v1597 = vpop.permute.xlu0 %1596
  %1602 = vrot.lane.b32.xlu0 %v1532, 16
  %v1603 = vpop.permute.xlu0 %1602
  %1604 = vrot.lane.b32.xlu0 %v1551, 16
  %v1605 = vpop.permute.xlu0 %1604
  %1610 = vrot.lane.b32.xlu0 %v1570, 24
  %v1611 = vpop.permute.xlu0 %1610
  %1612 = vrot.lane.b32.xlu0 %v1589, 24
  %v1613 = vpop.permute.xlu0 %1612
  %v1616 = vsel %vm270, %v1456, %v1595
  %v1617 = vsel %vm270, %v1475, %v1597
  %v1618 = vsel %vm718, %v1616, %v1603
  %v1619 = vsel %vm718, %v1617, %v1605
  %v1620 = vsel %vm721, %v1618, %v1611
  %v1621 = vsel %vm721, %v1619, %v1613
  %v1622 = vpack.c.bf16 %v1621, %v1620
  %s1623 = scalar_lea.vmem %s8, 16
  %v1624 = vld [vmem:[%s1623] sm:$0xf]
  %v1625 = vld [vmem:[%s1623 + $0x4] sm:$0xf]
  %v1626 = vld [vmem:[%s1623 + $0x8] sm:$0xf]
  %v1627 = vld [vmem:[%s1623 + $0xc] sm:$0xf]
  %s1628 = scalar_lea.vmem %s9, 1
  %v1629 = vld [vmem:[%s1628] sm:$0x1]
  %v1631 = vperm.slane %v1629, 0
  %v1637 = vunpack.c.l.b16 %v1624
  %v1638 = vunpack.c.l.b16 %v1625
  %v1639 = vunpack.c.l.b16 %v1626
  %v1640 = vunpack.c.l.b16 %v1627
  %v1641 = vpack.c.b16 %v1638, %v1637
  %v1642 = vpack.c.b16 %v1640, %v1639
  %v1646 = vsel %vm100, %v1622, 0
  %1648 = vmatpush.bf16.msra.mxu0 0
  %1649 = vmatpush.bf16.msra.mxu0 0
  %1650 = vmatpush.bf16.msra.mxu0 0
  %1651 = vmatpush.bf16.msra.mxu0 0
  %1652 = vmatpush.bf16.msra.mxu0 0
  %1653 = vmatpush.bf16.msra.mxu0 0
  %1654 = vmatpush.bf16.msra.mxu0 %v1642
  %1655 = vmatpush.bf16.msra.mxu0 %v1641
  %1656 = vmatmul.bf16.gmra.mxu0 %v1646
  %v1657 = vpop.f32.mrf.mxu0
  %v1658 = vadd.f32 %v1631, %v1657
  %v1659 = vpop.f32.mrf.mxu0
  %v1660 = vadd.f32 %v1631, %v1659
  %1661 = vdwg.mxu0
  %v1662 = vadd.f32 %v978, %v1658
  %v1663 = vadd.f32 %v979, %v1660
  %s1664 = scalar_lea.vmem %s10, 1
  %v1665 = vld [vmem:[%s1664] sm:$0x1]
  %s1666 = scalar_lea.vmem %s11, 1
  %v1667 = vld [vmem:[%s1666] sm:$0x1]
  %v1668 = vsel %vm100, %v1662, 0.0
  %1669 = vadd.xlane.f32.xlu0 %v1668
  %v1670 = vpop.xlane.xlu0 %1669
  %v1671 = vsel %vm100, %v1663, 0.0
  %1672 = vadd.xlane.f32.xlu0 %v1671
  %v1673 = vpop.xlane.xlu0 %1672
  %v1674 = vmul.f32 %v1670, %v778
  %v1675 = vmul.f32 %v1673, %v778
  %v1676 = vsub.f32 %v1662, %v1674
  %v1677 = vsub.f32 %v1663, %v1675
  %v1678 = vmul.f32 %v1676, %v1676
  %v1679 = vmul.f32 %v1677, %v1677
  %v1680 = vsel %vm100, %v1678, 0.0
  %1681 = vadd.xlane.f32.xlu0 %v1680
  %v1682 = vpop.xlane.xlu0 %1681
  %v1683 = vsel %vm100, %v1679, 0.0
  %1684 = vadd.xlane.f32.xlu0 %v1683
  %v1685 = vpop.xlane.xlu0 %1684
  %v1686 = vmul.f32 %v1682, %v778
  %v1687 = vmul.f32 %v1685, %v778
  %v1688 = vadd.f32 %v1686, 1e-05
  %v1689 = vadd.f32 %v1687, 1e-05
  %v1690 = vrsqrt.pop %v1688
  %v1691 = vmul.f32 %v1690, %v1688
  %v1692 = vmul.f32 %v1691, %v1690
  %v1693 = vmul.f32 0.5, %v1692
  %v1694 = vsub.f32 1.5, %v1693
  %v1695 = vmul.f32 %v1690, %v1694
  %vm1696 = vweird.f32 %v1688
  %vm1697 = vweird.f32 %v1690
  %vm1698 = vmor %vm1696, %vm1697
  %v1699 = vsel %vm1698, %v1690, %v1695
  %v1700 = vrsqrt.pop %v1689
  %v1701 = vmul.f32 %v1700, %v1689
  %v1702 = vmul.f32 %v1701, %v1700
  %v1703 = vmul.f32 0.5, %v1702
  %v1704 = vsub.f32 1.5, %v1703
  %v1705 = vmul.f32 %v1700, %v1704
  %vm1706 = vweird.f32 %v1689
  %vm1707 = vweird.f32 %v1700
  %vm1708 = vmor %vm1706, %vm1707
  %v1709 = vsel %vm1708, %v1700, %v1705
  %v1710 = vmul.f32 %v1676, %v1699
  %v1711 = vmul.f32 %v1677, %v1709
  %v1713 = vperm.slane %v1665, 0
  %v1715 = vmul.f32 %v1710, %v1713
  %v1716 = vmul.f32 %v1711, %v1713
  %v1718 = vperm.slane %v1667, 0
  %v1720 = vadd.f32 %v1715, %v1718
  %v1721 = vadd.f32 %v1716, %v1718
  %v1722 = vpack.c.bf16 %v1721, %v1720
  %s1723 = scalar_lea.vmem %s12, 16
  %v1724 = vld [vmem:[%s1723] sm:$0xf]
  %v1725 = vld [vmem:[%s1723 + $0x4] sm:$0xf]
  %v1726 = vld [vmem:[%s1723 + $0x8] sm:$0xf]
  %v1727 = vld [vmem:[%s1723 + $0xc] sm:$0xf]
  %s1728 = scalar_lea.vmem %s13, 1
  %v1729 = vld [vmem:[%s1728] sm:$0x1]
  %v1731 = vperm.slane %v1729, 0
  %v1737 = vunpack.c.l.b16 %v1724
  %v1738 = vunpack.c.l.b16 %v1725
  %v1739 = vunpack.c.l.b16 %v1726
  %v1740 = vunpack.c.l.b16 %v1727
  %v1741 = vpack.c.b16 %v1738, %v1737
  %v1742 = vpack.c.b16 %v1740, %v1739
  %v1746 = vsel %vm100, %v1722, 0
  %1748 = vmatpush.bf16.msra.mxu0 0
  %1749 = vmatpush.bf16.msra.mxu0 0
  %1750 = vmatpush.bf16.msra.mxu0 0
  %1751 = vmatpush.bf16.msra.mxu0 0
  %1752 = vmatpush.bf16.msra.mxu0 0
  %1753 = vmatpush.bf16.msra.mxu0 0
  %1754 = vmatpush.bf16.msra.mxu0 %v1742
  %1755 = vmatpush.bf16.msra.mxu0 %v1741
  %1756 = vmatmul.bf16.gmra.mxu0 %v1746
  %v1757 = vpop.f32.mrf.mxu0
  %v1758 = vadd.f32 %v1731, %v1757
  %v1759 = vpop.f32.mrf.mxu0
  %v1760 = vadd.f32 %v1731, %v1759
  %1761 = vdwg.mxu0
  %v1762 = vmax.f32 %v1758, 0.0
  %v1763 = vmax.f32 %v1760, 0.0
  %v1764 = vpack.c.bf16 %v1763, %v1762
  %s1765 = scalar_lea.vmem %s14, 32
  %v1766 = vld [vmem:[%s1765] sm:$0xf]
  %v1767 = vld [vmem:[%s1765 + $0x4] sm:$0xf]
  %v1768 = vld [vmem:[%s1765 + $0x8] sm:$0xf]
  %v1769 = vld [vmem:[%s1765 + $0xc] sm:$0xf]
  %v1770 = vld [vmem:[%s1765 + $0x10] sm:$0xf]
  %v1771 = vld [vmem:[%s1765 + $0x14] sm:$0xf]
  %v1772 = vld [vmem:[%s1765 + $0x18] sm:$0xf]
  %v1773 = vld [vmem:[%s1765 + $0x1c] sm:$0xf]
  %s1774 = scalar_lea.vmem %s15, 1
  %v1775 = vld [vmem:[%s1774] sm:$0x1]
  %v1777 = vperm.slane %v1775, 0
  %v1787 = vunpack.c.l.b16 %v1766
  %v1788 = vunpack.c.l.b16 %v1767
  %v1789 = vunpack.c.l.b16 %v1768
  %v1790 = vunpack.c.l.b16 %v1769
  %v1791 = vunpack.c.l.b16 %v1770
  %v1792 = vunpack.c.l.b16 %v1771
  %v1793 = vunpack.c.l.b16 %v1772
  %v1794 = vunpack.c.l.b16 %v1773
  %v1795 = vpack.c.b16 %v1788, %v1787
  %v1796 = vpack.c.b16 %v1790, %v1789
  %v1797 = vpack.c.b16 %v1792, %v1791
  %v1798 = vpack.c.b16 %v1794, %v1793
  %v1804 = vsel %vm904, %v1764, 0
  %1806 = vmatpush.bf16.msra.mxu0 0
  %1807 = vmatpush.bf16.msra.mxu0 0
  %1808 = vmatpush.bf16.msra.mxu0 0
  %1809 = vmatpush.bf16.msra.mxu0 0
  %1810 = vmatpush.bf16.msra.mxu0 %v1798
  %1811 = vmatpush.bf16.msra.mxu0 %v1797
  %1812 = vmatpush.bf16.msra.mxu0 %v1796
  %1813 = vmatpush.bf16.msra.mxu0 %v1795
  %1814 = vmatmul.bf16.gmra.mxu0 %v1804
  %v1815 = vpop.f32.mrf.mxu0
  %v1816 = vadd.f32 %v1777, %v1815
  %v1817 = vpop.f32.mrf.mxu0
  %v1818 = vadd.f32 %v1777, %v1817
  %1819 = vdwg.mxu0
  %v1820 = vadd.f32 %v1720, %v1816
  %v1821 = vadd.f32 %v1721, %v1818
  %s1822 = scalar_lea.vmem %s16, 1
  %v1823 = vld [vmem:[%s1822] sm:$0x1]
  %s1824 = scalar_lea.vmem %s17, 1
  %v1825 = vld [vmem:[%s1824] sm:$0x1]
  %v1826 = vsel %vm100, %v1820, 0.0
  %1827 = vadd.xlane.f32.xlu0 %v1826
  %v1828 = vpop.xlane.xlu0 %1827
  %v1829 = vsel %vm100, %v1821, 0.0
  %1830 = vadd.xlane.f32.xlu0 %v1829
  %v1831 = vpop.xlane.xlu0 %1830
  %v1832 = vmul.f32 %v1828, %v778
  %v1833 = vmul.f32 %v1831, %v778
  %v1834 = vsub.f32 %v1820, %v1832
  %v1835 = vsub.f32 %v1821, %v1833
  %v1836 = vmul.f32 %v1834, %v1834
  %v1837 = vmul.f32 %v1835, %v1835
  %v1838 = vsel %vm100, %v1836, 0.0
  %1839 = vadd.xlane.f32.xlu0 %v1838
  %v1840 = vpop.xlane.xlu0 %1839
  %v1841 = vsel %vm100, %v1837, 0.0
  %1842 = vadd.xlane.f32.xlu0 %v1841
  %v1843 = vpop.xlane.xlu0 %1842
  %v1844 = vmul.f32 %v1840, %v778
  %v1845 = vmul.f32 %v1843, %v778
  %v1846 = vadd.f32 %v1844, 1e-05
  %v1847 = vadd.f32 %v1845, 1e-05
  %v1848 = vrsqrt.pop %v1846
  %v1849 = vmul.f32 %v1848, %v1846
  %v1850 = vmul.f32 %v1849, %v1848
  %v1851 = vmul.f32 0.5, %v1850
  %v1852 = vsub.f32 1.5, %v1851
  %v1853 = vmul.f32 %v1848, %v1852
  %vm1854 = vweird.f32 %v1846
  %vm1855 = vweird.f32 %v1848
  %vm1856 = vmor %vm1854, %vm1855
  %v1857 = vsel %vm1856, %v1848, %v1853
  %v1858 = vrsqrt.pop %v1847
  %v1859 = vmul.f32 %v1858, %v1847
  %v1860 = vmul.f32 %v1859, %v1858
  %v1861 = vmul.f32 0.5, %v1860
  %v1862 = vsub.f32 1.5, %v1861
  %v1863 = vmul.f32 %v1858, %v1862
  %vm1864 = vweird.f32 %v1847
  %vm1865 = vweird.f32 %v1858
  %vm1866 = vmor %vm1864, %vm1865
  %v1867 = vsel %vm1866, %v1858, %v1863
  %v1868 = vmul.f32 %v1834, %v1857
  %v1869 = vmul.f32 %v1835, %v1867
  %v1871 = vperm.slane %v1823, 0
  %v1873 = vmul.f32 %v1868, %v1871
  %v1874 = vmul.f32 %v1869, %v1871
  %v1876 = vperm.slane %v1825, 0
  %v1878 = vadd.f32 %v1873, %v1876
  %v1879 = vadd.f32 %v1874, %v1876
  %v1880 = vperm.slane %v74, 0
  %v1881 = vlaneseq
  %v1882 = vshrl.u32 %v1881, 7
  %1884 = vset.pattern.permute.xlu0 %v1882
  %1885 = vperm.xlu0 %1884, %v1880
  %v1886 = vpop.permute.xlu0 %1885
  %v1887 = vperm.slane %v74, 1
  %v1888 = vlaneseq
  %v1889 = vshrl.u32 %v1888, 7
  %1891 = vset.pattern.permute.xlu0 %v1889
  %1892 = vperm.xlu0 %1891, %v1887
  %v1893 = vpop.permute.xlu0 %1892
  %v1894 = vmul.f32 %v1878, %v1886
  %v1895 = vmul.f32 %v1879, %v1893
  %v1896 = vsel %vm100, %v1894, 0.0
  %v1897 = vrot.slane %v1896, 4
  %v1898 = vadd.f32 %v1896, %v1897
  %v1899 = vrot.slane %v1898, 2
  %v1900 = vadd.f32 %v1898, %v1899
  %v1901 = vrot.slane %v1900, 1
  %v1902 = vadd.f32 %v1900, %v1901
  %v1903 = vsel %vm100, %v1895, 0.0
  %v1904 = vrot.slane %v1903, 4
  %v1905 = vadd.f32 %v1903, %v1904
  %v1906 = vrot.slane %v1905, 2
  %v1907 = vadd.f32 %v1905, %v1906
  %v1908 = vrot.slane %v1907, 1
  %v1909 = vadd.f32 %v1907, %v1908
  %vm1910 = vcmask 58368
  %v1911 = vsel %vm1910, %v74, 0.0
  %1912 = vadd.xlane.f32.xlu0 %v1911
  %v1913 = vpop.xlane.xlu0 %1912
  %v1914 = vmax.f32 %v1913, 1e-09
  %v1915 = vrcp.pop %v1914
  %v1917 = vrot.slane %v1915, 1
  %v1920 = vmul.f32 %v1902, %v1915
  %v1921 = vmul.f32 %v1909, %v1917
  %v1922 = vpack.c.bf16 %v1920, %v1920
  %v1923 = vpack.c.bf16 %v1921, %v1921
  %v1924 = vld [vmem:[%s18] sm:$0xf]
  %v1925 = vld [vmem:[%s18 + $0x4] sm:$0xf]
  %v1926 = vld [vmem:[%s18 + $0x8] sm:$0xf]
  %v1927 = vld [vmem:[%s18 + $0xc] sm:$0xf]
  %v1928 = vld [vmem:[%s19] sm:$0x1]
  %v1930 = vperm.slane %v1928, 0
  %v1934 = vunpack.c.l.b16 %v1922
  %v1935 = vunpack.c.l.b16 %v1923
  %v1936 = vrot.slane %v1935, 7
  %vm1937 = vcmask 1041409
  %v1938 = vsel %vm1937, %v1936, %v1934
  %v1939 = vpack.c.b16 %v1938, %v1938
  %v1944 = vunpack.c.l.b16 %v1924
  %v1945 = vunpack.c.l.b16 %v1925
  %v1946 = vunpack.c.l.b16 %v1926
  %v1947 = vunpack.c.l.b16 %v1927
  %v1948 = vpack.c.b16 %v1945, %v1944
  %v1949 = vpack.c.b16 %v1947, %v1946
  %v1953 = vsel %vm100, %v1939, 0
  %1955 = vmatpush.bf16.msra.mxu0 0
  %1956 = vmatpush.bf16.msra.mxu0 0
  %1957 = vmatpush.bf16.msra.mxu0 0
  %1958 = vmatpush.bf16.msra.mxu0 0
  %1959 = vmatpush.bf16.msra.mxu0 0
  %1960 = vmatpush.bf16.msra.mxu0 0
  %1961 = vmatpush.bf16.msra.mxu0 %v1949
  %1962 = vmatpush.bf16.msra.mxu0 %v1948
  %1963 = vmatmul.bf16.gmra.mxu0 %v1953
  %v1964 = vpop.f32.mrf.mxu0
  %v1965 = vadd.f32 %v1930, %v1964
  %v1966 = vpop.f32.mrf.mxu0
  %1967 = vdwg.mxu0
  %v1968 = vmax.f32 %v1965, 0.0
  %v1969 = vpack.c.bf16 %v1968, %v1968
  %v1970 = vld [vmem:[%s20] sm:$0xf]
  %v1971 = vld [vmem:[%s20 + $0x4] sm:$0xf]
  %v1972 = vld [vmem:[%s20 + $0x8] sm:$0xf]
  %v1973 = vld [vmem:[%s20 + $0xc] sm:$0xf]
  %v1974 = vld [vmem:[%s21] sm:$0x1]
  %v1976 = vperm.slane %v1974, 0
  %v1982 = vunpack.c.l.b16 %v1970
  %v1983 = vunpack.c.l.b16 %v1971
  %v1984 = vunpack.c.l.b16 %v1972
  %v1985 = vunpack.c.l.b16 %v1973
  %v1986 = vpack.c.b16 %v1983, %v1982
  %v1987 = vpack.c.b16 %v1985, %v1984
  %v1991 = vsel %vm100, %v1969, 0
  %1993 = vmatpush.bf16.msra.mxu0 0
  %1994 = vmatpush.bf16.msra.mxu0 0
  %1995 = vmatpush.bf16.msra.mxu0 0
  %1996 = vmatpush.bf16.msra.mxu0 0
  %1997 = vmatpush.bf16.msra.mxu0 0
  %1998 = vmatpush.bf16.msra.mxu0 0
  %1999 = vmatpush.bf16.msra.mxu0 %v1987
  %2000 = vmatpush.bf16.msra.mxu0 %v1986
  %2001 = vmatmul.bf16.gmra.mxu0 %v1991
  %v2002 = vpop.f32.mrf.mxu0
  %v2003 = vadd.f32 %v1976, %v2002
  %v2004 = vpop.f32.mrf.mxu0
  %2005 = vdwg.mxu0
  %v2006 = vlaneseq
  %v2007 = vand.u32 %v2006, 127
  %v2008 = vsub.f32 0.0, %v2003
  %v2009 = vmul.f32 %v2008, 1.442695
  %v2010 = vpow.pop %v2009
  %v2011 = vadd.f32 %v2010, 1.0
  %v2012 = vrcp.pop %v2011
  %v2013 = vmul.f32 %v2011, %v2012
  %v2014 = vsub.f32 1.0, %v2013
  %v2015 = vmul.f32 %v2012, %v2014
  %v2016 = vadd.f32 %v2012, %v2015
  %vm2017 = vweird.f32 %v2011
  %vm2018 = vweird.f32 %v2012
  %vm2019 = vmor %vm2017, %vm2018
  %v2020 = vsel %vm2019, %v2012, %v2016
  %v2021 = vand.u32 2147483647, %v2011
  %vm2022 = vcmp.eq.f32.partialorder %v2021, 8.507059e+37
  %v2023 = vand.u32 %v2011, 2147483648
  %v2024 = vor.u32 1.1754944e-38, %v2023
  %v2025 = vsel %vm2022, %v2024, %v2020
  %v2026 = vmul.f32 1.0, %v2025
  %vm2027 = vcmp.eq.s32.totalorder %v2007, 2
  %v2028 = vsel %vm2027, %v2026, %v2003
  %2029 = vst [vmem:[%s22] sm:$0x3] %v2028
  // Predicated region
  $region90: #{multitask_forward.1} parent=0 // pred_check
    _
  $region91: #{multitask_forward.1} parent=0 // pred_check_branch
    %2031 = sbr.rel (0) target = $region93
  $region92: #{multitask_forward.1} parent=0 // pred_region
    _
  $region93: #{multitask_forward.1} parent=0 // pred_fallthru
    _
  // Predicated region
  $region94: #{multitask_forward.1} parent=0 // pred_check
    _
  $region95: #{multitask_forward.1} parent=0 // pred_check_branch
    %2033 = sbr.rel (0) target = $region97
  $region96: #{multitask_forward.1} parent=0 // pred_region
    _
  $region97: #{multitask_forward.1} parent=0 // pred_fallthru
    _

</llo_original>
